<compile_context>
chip_gen: v7x
topology: tpu7x:2x2x1
jax: 0.10.0
libtpu: 0.0.40
codegen_flags: <defaults>
</compile_context>

<pallas_src>
import jax
import jax.numpy as jnp
from jax.experimental import pallas as pl
from jax.experimental.pallas import tpu as pltpu

EPS = 1e-5


def _gbcnn_kernel(x_ref, a_ref, w1_ref, w2_ref, w3_ref, wh1_ref, vec_ref,
                  o_ref, cat_ref):
    a = a_ref[...]            # (N, N)  bf16 (fast path) or f32 (exact path)
    v = vec_ref[...]          # (8, 256) packed gammas / betas / head vectors

    def conv_bn_relu(h, w_ref, row):
        cin = w_ref.shape[0] // 2          # static
        cout = w_ref.shape[1]
        # Neighbour sum on the MXU (bf16 inputs on the fast path, f32 accumulate).
        agg = jnp.dot(a, h.astype(a.dtype), preferred_element_type=jnp.float32)   # (N, cin)
        # Stage [h | agg] contiguously in VMEM -> ONE fused MXU matmul with K = 2*cin.
        cat_ref[:, 0:cin] = h
        cat_ref[:, cin:2 * cin] = agg
        z = jnp.dot(cat_ref[:, 0:2 * cin], w_ref[...],
                    preferred_element_type=jnp.float32)                            # (N, cout)
        # Train-mode BatchNorm, single-pass stats.  (GraphConv bias is absorbed by mu.)
        mu = jnp.mean(z, axis=0, keepdims=True)
        var = jnp.maximum(jnp.mean(z * z, axis=0, keepdims=True) - mu * mu, 0.0)
        g = v[row:row + 1, 0:cout]
        be = v[row + 1:row + 2, 0:cout]
        z = (z - mu) * (jax.lax.rsqrt(var + EPS) * g) + be
        return jnp.maximum(z, 0.0)                                                 # ReLU

    h = conv_bn_relu(x_ref[...], w1_ref, 0)     # (N, 64)
    h = conv_bn_relu(h, w2_ref, 2)              # (N, 128)
    h = conv_bn_relu(h, w3_ref, 4)              # (N, 256)

    # Head: Linear(256,128) + ReLU on the MXU, then the 1-wide Linear(128,1) as a
    # VPU multiply + lane (XLU) reduction instead of a wasted 1-column MXU matmul.
    z = jnp.maximum(
        jnp.dot(h, wh1_ref[...], preferred_element_type=jnp.float32) + v[6:7, 0:128],
        0.0)                                                                        # (N, 128)
    o_ref[...] = (jnp.sum(z * v[7:8, 0:128], axis=-1, keepdims=True)
                  + v[7:8, 128:129])                                                # (N, 1)


def gbcnn_forward(x, edge_index, packed, *, agg_dtype=jnp.bfloat16):
    """x: (N, input_dim) f32, edge_index: (2, E) int32, packed = pack_params(...)."""
    w1, w2, w3, wh1, vecs = packed
    n = x.shape[0]
    src, dst = edge_index[0], edge_index[1]
    # Dense adjacency with A[dst, src] = edge multiplicity (sum aggregation == A @ X).
    # bf16 is exact for multiplicities <= 256; accumulation stays f32 inside the kernel.
    adj = jnp.zeros((n, n), jnp.float32).at[dst, src].add(1.0).astype(agg_dtype)

    args = (x.astype(jnp.float32), adj, w1, w2, w3, wh1, vecs)
    cat_cols = max(w1.shape[0], w2.shape[0], w3.shape[0])   # = 2 * max(cin) = 256 here
    vmem = pl.BlockSpec(memory_space=pltpu.MemorySpace.VMEM)

    out = pl.pallas_call(
        _gbcnn_kernel,
        out_shape=jax.ShapeDtypeStruct((n, 1), jnp.float32),
        in_specs=[vmem] * len(args),
        out_specs=vmem,
        scratch_shapes=[pltpu.VMEM((n, cat_cols), jnp.float32)],
    )(*args)
    return out[:, 0]   # .squeeze(-1)


# ----------------------------- parameters ---------------------------------------------

def init_torch_params(key, input_dim=6):
    """Parameters mirroring the PyTorch module (GraphConv wr/wn/b, BN g/be, head)."""
    dims = [(input_dim, 64), (64, 128), (128, 256)]
    ks = iter(jax.random.split(key, 32))

    def rand(shape, scale=0.1):
        return (scale * jax.random.normal(next(ks), shape)).astype(jnp.float32)

    layers = []
    for cin, cout in dims:
        layers.append(dict(
            wr=rand((cin, cout)),            # GraphConv lin_root (in, out)
            wn=rand((cin, cout)),            # GraphConv lin_rel  (in, out)
            b=rand((1, cout)),               # GraphConv bias
            g=(1.0 + rand((1, cout))).astype(jnp.float32),   # BN gamma
            be=rand((1, cout)),              # BN beta
        ))
    head = dict(wh1=rand((256, 128)), bh1=rand((1, 128)),
                wh2=rand((128, 1)), bh2=rand((1, 1)))
    return layers, head


def pack_params(layers, head):
    """Fuse wr/wn along K and pack all (1,C) vectors into one (8,256) array."""
    fused = [jnp.concatenate([l["wr"], l["wn"]], axis=0) for l in layers]  # (2*cin, cout)
    vecs = jnp.zeros((8, 256), jnp.float32)
    rows = [(0, 64), (2, 128), (4, 256)]
    for (r, c), l in zip(rows, layers):
        vecs = vecs.at[r, :c].set(l["g"][0])
        vecs = vecs.at[r + 1, :c].set(l["be"][0])
    vecs = vecs.at[6, :128].set(head["bh1"][0])
    vecs = vecs.at[7, :128].set(head["wh2"][:, 0])
    vecs = vecs.at[7, 128].set(head["bh2"][0, 0])
    # GraphConv bias b is intentionally NOT packed: train-mode BN cancels it exactly.
    return (fused[0], fused[1], fused[2], head["wh1"], vecs)


# ----------------------------- reference ----------------------------------------------

def gbcnn_reference(x, edge_index, layers, head, agg_dtype=jnp.float32):
    """Pure-JAX reference mirroring the PyTorch forward (bias kept, two-pass variance)."""
    n = x.shape[0]
    src, dst = edge_index[0], edge_index[1]
    adj = jnp.zeros((n, n), jnp.float32).at[dst, src].add(1.0).astype(agg_dtype)
    h = x
    for l in layers:
        agg = jnp.dot(adj, h.astype(agg_dtype), preferred_element_type=jnp.float32)
        z = h @ l["wr"] + agg @ l["wn"] + l["b"]
        mu = z.mean(axis=0, keepdims=True)
        var = ((z - mu) ** 2).mean(axis=0, keepdims=True)
        h = jnp.maximum((z - mu) / jnp.sqrt(var + EPS) * l["g"] + l["be"], 0.0)
    z = jnp.maximum(h @ head["wh1"] + head["bh1"], 0.0)
    return (z @ head["wh2"] + head["bh2"])[:, 0]


if __name__ == "__main__":
    key = jax.random.PRNGKey(0)
    k_x, k_e, k_p = jax.random.split(key, 3)

    N, E, INPUT_DIM = 64, 256, 6
    x = jax.random.normal(k_x, (N, INPUT_DIM), dtype=jnp.float32)
    edge_index = jax.random.randint(k_e, (2, E), 0, N, dtype=jnp.int32)

    layers, head = init_torch_params(k_p, INPUT_DIM)
    packed = pack_params(layers, head)

    # 1) Exactness: f32-aggregation path vs. PyTorch-semantics reference
    #    (validates bias drop, single-pass BN stats, fused matmul, reduction head).
    out_f32 = jax.block_until_ready(
        gbcnn_forward(x, edge_index, packed, agg_dtype=jnp.float32))
    ref_f32 = gbcnn_reference(x, edge_index, layers, head, agg_dtype=jnp.float32)
    assert out_f32.shape == (N,)
    assert jnp.allclose(out_f32, ref_f32, atol=5e-4, rtol=5e-4), (
        "f32 path mismatch, max|diff|=%g" % float(jnp.max(jnp.abs(out_f32 - ref_f32))))

    # 2) Perf default: bf16 adjacency/aggregation (f32 accumulate) vs. matched reference.
    out_bf16 = jax.block_until_ready(gbcnn_forward(x, edge_index, packed))
    ref_bf16 = gbcnn_reference(x, edge_index, layers, head, agg_dtype=jnp.bfloat16)
    assert jnp.allclose(out_bf16, ref_bf16, atol=1e-2, rtol=1e-2), (
        "bf16 path mismatch, max|diff|=%g" % float(jnp.max(jnp.abs(out_bf16 - ref_bf16))))

    print("KERNEL_OK")
</pallas_src>

<mosaic_0001>
module attributes {stable_mosaic.version = 11 : i64} {
  func.func @_gbcnn_kernel(%arg0: memref<64x6xf32, #tpu.memory_space<vmem>>, %arg1: memref<64x64xf32, #tpu.memory_space<vmem>>, %arg2: memref<12x64xf32, #tpu.memory_space<vmem>>, %arg3: memref<128x128xf32, #tpu.memory_space<vmem>>, %arg4: memref<256x256xf32, #tpu.memory_space<vmem>>, %arg5: memref<256x128xf32, #tpu.memory_space<vmem>>, %arg6: memref<8x256xf32, #tpu.memory_space<vmem>>, %arg7: memref<64x1xf32, #tpu.memory_space<vmem>>, %arg8: memref<64x256xf32, #tpu.memory_space<vmem>>) attributes {dimension_semantics = [], scalar_prefetch = 0 : i64, scratch_operands = 1 : i64, tpu.core_type = #tpu.core_type<tc>} {
    %c0 = arith.constant 0 : index
    %c0_0 = arith.constant 0 : index
    %0 = vector.load %arg1[%c0, %c0_0] : memref<64x64xf32, #tpu.memory_space<vmem>>, vector<64x64xf32>
    %c0_1 = arith.constant 0 : index
    %c0_2 = arith.constant 0 : index
    %1 = vector.load %arg6[%c0_1, %c0_2] : memref<8x256xf32, #tpu.memory_space<vmem>>, vector<8x256xf32>
    %c0_3 = arith.constant 0 : index
    %c0_4 = arith.constant 0 : index
    %2 = vector.load %arg0[%c0_3, %c0_4] : memref<64x6xf32, #tpu.memory_space<vmem>>, vector<64x6xf32>
    %cst = arith.constant dense<0.000000e+00> : vector<64x6xf32>
    %3 = tpu.matmul %0, %2, %cst {dimension_numbers = #tpu.dot_dimension_numbers<[1], [0], [0], [1], [0, 0, 1, 1], [], []>} : vector<64x64xf32>, vector<64x6xf32>, vector<64x6xf32> -> vector<64x6xf32>
    %c0_5 = arith.constant 0 : index
    %c0_6 = arith.constant 0 : index
    %4 = vector.load %arg8[%c0_5, %c0_6] : memref<64x256xf32, #tpu.memory_space<vmem>>, vector<64x6xf32>
    tpu.vector_store %arg8[%c0_5, %c0_6], %2 {strides = array<i32>} : memref<64x256xf32, #tpu.memory_space<vmem>>, vector<64x6xf32>,
    %c0_7 = arith.constant 0 : index
    %c6 = arith.constant 6 : index
    %5 = vector.load %arg8[%c0_7, %c6] : memref<64x256xf32, #tpu.memory_space<vmem>>, vector<64x6xf32>
    tpu.vector_store %arg8[%c0_7, %c6], %3 {strides = array<i32>} : memref<64x256xf32, #tpu.memory_space<vmem>>, vector<64x6xf32>,
    %c0_8 = arith.constant 0 : index
    %c0_9 = arith.constant 0 : index
    %6 = vector.load %arg8[%c0_8, %c0_9] : memref<64x256xf32, #tpu.memory_space<vmem>>, vector<64x12xf32>
    %c0_10 = arith.constant 0 : index
    %c0_11 = arith.constant 0 : index
    %7 = vector.load %arg2[%c0_10, %c0_11] : memref<12x64xf32, #tpu.memory_space<vmem>>, vector<12x64xf32>
    %cst_12 = arith.constant dense<0.000000e+00> : vector<64x64xf32>
    %8 = tpu.matmul %6, %7, %cst_12 {dimension_numbers = #tpu.dot_dimension_numbers<[1], [0], [0], [1], [0, 0, 1, 1], [], []>} : vector<64x12xf32>, vector<12x64xf32>, vector<64x64xf32> -> vector<64x64xf32>
    %cst_13 = arith.constant dense<0.000000e+00> : vector<64xf32>
    %9 = vector.multi_reduction <add>, %8, %cst_13 [0] : vector<64x64xf32> to vector<64xf32>
    %10 = vector.shape_cast %9 : vector<64xf32> to vector<1x64xf32>
    %cst_14 = arith.constant 6.400000e+01 : f32
    %11 = vector.broadcast %cst_14 : f32 to vector<1x64xf32>
    %12 = arith.divf %10, %11 : vector<1x64xf32>
    %13 = arith.mulf %8, %8 : vector<64x64xf32>
    %cst_15 = arith.constant dense<0.000000e+00> : vector<64xf32>
    %14 = vector.multi_reduction <add>, %13, %cst_15 [0] : vector<64x64xf32> to vector<64xf32>
    %15 = vector.shape_cast %14 : vector<64xf32> to vector<1x64xf32>
    %cst_16 = arith.constant 6.400000e+01 : f32
    %16 = vector.broadcast %cst_16 : f32 to vector<1x64xf32>
    %17 = arith.divf %15, %16 : vector<1x64xf32>
    %18 = arith.mulf %12, %12 : vector<1x64xf32>
    %19 = arith.subf %17, %18 : vector<1x64xf32>
    %cst_17 = arith.constant 0.000000e+00 : f32
    %20 = vector.broadcast %cst_17 : f32 to vector<1x64xf32>
    %21 = arith.maximumf %19, %20 : vector<1x64xf32>
    %22 = vector.extract_strided_slice %1 {offsets = [0, 0], sizes = [1, 64], strides = [1, 1]} : vector<8x256xf32> to vector<1x64xf32>
    %23 = vector.extract_strided_slice %1 {offsets = [1, 0], sizes = [1, 64], strides = [1, 1]} : vector<8x256xf32> to vector<1x64xf32>
    %24 = vector.broadcast %12 : vector<1x64xf32> to vector<64x64xf32>
    %25 = arith.subf %8, %24 : vector<64x64xf32>
    %cst_18 = arith.constant 9.99999974E-6 : f32
    %26 = vector.broadcast %cst_18 : f32 to vector<1x64xf32>
    %27 = arith.addf %21, %26 : vector<1x64xf32>
    %28 = math.rsqrt %27 : vector<1x64xf32>
    %29 = arith.mulf %28, %22 : vector<1x64xf32>
    %30 = vector.broadcast %29 : vector<1x64xf32> to vector<64x64xf32>
    %31 = arith.mulf %25, %30 : vector<64x64xf32>
    %32 = vector.broadcast %23 : vector<1x64xf32> to vector<64x64xf32>
    %33 = arith.addf %31, %32 : vector<64x64xf32>
    %cst_19 = arith.constant 0.000000e+00 : f32
    %34 = vector.broadcast %cst_19 : f32 to vector<64x64xf32>
    %35 = arith.maximumf %33, %34 : vector<64x64xf32>
    %cst_20 = arith.constant dense<0.000000e+00> : vector<64x64xf32>
    %36 = tpu.matmul %0, %35, %cst_20 {dimension_numbers = #tpu.dot_dimension_numbers<[1], [0], [0], [1], [0, 0, 1, 1], [], []>} : vector<64x64xf32>, vector<64x64xf32>, vector<64x64xf32> -> vector<64x64xf32>
    %c0_21 = arith.constant 0 : index
    %c0_22 = arith.constant 0 : index
    %37 = vector.load %arg8[%c0_21, %c0_22] : memref<64x256xf32, #tpu.memory_space<vmem>>, vector<64x64xf32>
    tpu.vector_store %arg8[%c0_21, %c0_22], %35 {strides = array<i32>} : memref<64x256xf32, #tpu.memory_space<vmem>>, vector<64x64xf32>,
    %c0_23 = arith.constant 0 : index
    %c64 = arith.constant 64 : index
    %38 = vector.load %arg8[%c0_23, %c64] : memref<64x256xf32, #tpu.memory_space<vmem>>, vector<64x64xf32>
    tpu.vector_store %arg8[%c0_23, %c64], %36 {strides = array<i32>} : memref<64x256xf32, #tpu.memory_space<vmem>>, vector<64x64xf32>,
    %c0_24 = arith.constant 0 : index
    %c0_25 = arith.constant 0 : index
    %39 = vector.load %arg8[%c0_24, %c0_25] : memref<64x256xf32, #tpu.memory_space<vmem>>, vector<64x128xf32>
    %c0_26 = arith.constant 0 : index
    %c0_27 = arith.constant 0 : index
    %40 = vector.load %arg3[%c0_26, %c0_27] : memref<128x128xf32, #tpu.memory_space<vmem>>, vector<128x128xf32>
    %cst_28 = arith.constant dense<0.000000e+00> : vector<64x128xf32>
    %41 = tpu.matmul %39, %40, %cst_28 {dimension_numbers = #tpu.dot_dimension_numbers<[1], [0], [0], [1], [0, 0, 1, 1], [], []>} : vector<64x128xf32>, vector<128x128xf32>, vector<64x128xf32> -> vector<64x128xf32>
    %cst_29 = arith.constant dense<0.000000e+00> : vector<128xf32>
    %42 = vector.multi_reduction <add>, %41, %cst_29 [0] : vector<64x128xf32> to vector<128xf32>
    %43 = vector.shape_cast %42 : vector<128xf32> to vector<1x128xf32>
    %cst_30 = arith.constant 6.400000e+01 : f32
    %44 = vector.broadcast %cst_30 : f32 to vector<1x128xf32>
    %45 = arith.divf %43, %44 : vector<1x128xf32>
    %46 = arith.mulf %41, %41 : vector<64x128xf32>
    %cst_31 = arith.constant dense<0.000000e+00> : vector<128xf32>
    %47 = vector.multi_reduction <add>, %46, %cst_31 [0] : vector<64x128xf32> to vector<128xf32>
    %48 = vector.shape_cast %47 : vector<128xf32> to vector<1x128xf32>
    %cst_32 = arith.constant 6.400000e+01 : f32
    %49 = vector.broadcast %cst_32 : f32 to vector<1x128xf32>
    %50 = arith.divf %48, %49 : vector<1x128xf32>
    %51 = arith.mulf %45, %45 : vector<1x128xf32>
    %52 = arith.subf %50, %51 : vector<1x128xf32>
    %cst_33 = arith.constant 0.000000e+00 : f32
    %53 = vector.broadcast %cst_33 : f32 to vector<1x128xf32>
    %54 = arith.maximumf %52, %53 : vector<1x128xf32>
    %55 = vector.extract_strided_slice %1 {offsets = [2, 0], sizes = [1, 128], strides = [1, 1]} : vector<8x256xf32> to vector<1x128xf32>
    %56 = vector.extract_strided_slice %1 {offsets = [3, 0], sizes = [1, 128], strides = [1, 1]} : vector<8x256xf32> to vector<1x128xf32>
    %57 = vector.broadcast %45 : vector<1x128xf32> to vector<64x128xf32>
    %58 = arith.subf %41, %57 : vector<64x128xf32>
    %cst_34 = arith.constant 9.99999974E-6 : f32
    %59 = vector.broadcast %cst_34 : f32 to vector<1x128xf32>
    %60 = arith.addf %54, %59 : vector<1x128xf32>
    %61 = math.rsqrt %60 : vector<1x128xf32>
    %62 = arith.mulf %61, %55 : vector<1x128xf32>
    %63 = vector.broadcast %62 : vector<1x128xf32> to vector<64x128xf32>
    %64 = arith.mulf %58, %63 : vector<64x128xf32>
    %65 = vector.broadcast %56 : vector<1x128xf32> to vector<64x128xf32>
    %66 = arith.addf %64, %65 : vector<64x128xf32>
    %cst_35 = arith.constant 0.000000e+00 : f32
    %67 = vector.broadcast %cst_35 : f32 to vector<64x128xf32>
    %68 = arith.maximumf %66, %67 : vector<64x128xf32>
    %cst_36 = arith.constant dense<0.000000e+00> : vector<64x128xf32>
    %69 = tpu.matmul %0, %68, %cst_36 {dimension_numbers = #tpu.dot_dimension_numbers<[1], [0], [0], [1], [0, 0, 1, 1], [], []>} : vector<64x64xf32>, vector<64x128xf32>, vector<64x128xf32> -> vector<64x128xf32>
    %c0_37 = arith.constant 0 : index
    %c0_38 = arith.constant 0 : index
    %70 = vector.load %arg8[%c0_37, %c0_38] : memref<64x256xf32, #tpu.memory_space<vmem>>, vector<64x128xf32>
    tpu.vector_store %arg8[%c0_37, %c0_38], %68 {strides = array<i32>} : memref<64x256xf32, #tpu.memory_space<vmem>>, vector<64x128xf32>,
    %c0_39 = arith.constant 0 : index
    %c128 = arith.constant 128 : index
    %71 = vector.load %arg8[%c0_39, %c128] : memref<64x256xf32, #tpu.memory_space<vmem>>, vector<64x128xf32>
    tpu.vector_store %arg8[%c0_39, %c128], %69 {strides = array<i32>} : memref<64x256xf32, #tpu.memory_space<vmem>>, vector<64x128xf32>,
    %c0_40 = arith.constant 0 : index
    %c0_41 = arith.constant 0 : index
    %72 = vector.load %arg8[%c0_40, %c0_41] : memref<64x256xf32, #tpu.memory_space<vmem>>, vector<64x256xf32>
    %c0_42 = arith.constant 0 : index
    %c0_43 = arith.constant 0 : index
    %73 = vector.load %arg4[%c0_42, %c0_43] : memref<256x256xf32, #tpu.memory_space<vmem>>, vector<256x256xf32>
    %cst_44 = arith.constant dense<0.000000e+00> : vector<64x256xf32>
    %74 = tpu.matmul %72, %73, %cst_44 {dimension_numbers = #tpu.dot_dimension_numbers<[1], [0], [0], [1], [0, 0, 1, 1], [], []>} : vector<64x256xf32>, vector<256x256xf32>, vector<64x256xf32> -> vector<64x256xf32>
    %cst_45 = arith.constant dense<0.000000e+00> : vector<256xf32>
    %75 = vector.multi_reduction <add>, %74, %cst_45 [0] : vector<64x256xf32> to vector<256xf32>
    %76 = vector.shape_cast %75 : vector<256xf32> to vector<1x256xf32>
    %cst_46 = arith.constant 6.400000e+01 : f32
    %77 = vector.broadcast %cst_46 : f32 to vector<1x256xf32>
    %78 = arith.divf %76, %77 : vector<1x256xf32>
    %79 = arith.mulf %74, %74 : vector<64x256xf32>
    %cst_47 = arith.constant dense<0.000000e+00> : vector<256xf32>
    %80 = vector.multi_reduction <add>, %79, %cst_47 [0] : vector<64x256xf32> to vector<256xf32>
    %81 = vector.shape_cast %80 : vector<256xf32> to vector<1x256xf32>
    %cst_48 = arith.constant 6.400000e+01 : f32
    %82 = vector.broadcast %cst_48 : f32 to vector<1x256xf32>
    %83 = arith.divf %81, %82 : vector<1x256xf32>
    %84 = arith.mulf %78, %78 : vector<1x256xf32>
    %85 = arith.subf %83, %84 : vector<1x256xf32>
    %cst_49 = arith.constant 0.000000e+00 : f32
    %86 = vector.broadcast %cst_49 : f32 to vector<1x256xf32>
    %87 = arith.maximumf %85, %86 : vector<1x256xf32>
    %88 = vector.extract_strided_slice %1 {offsets = [4, 0], sizes = [1, 256], strides = [1, 1]} : vector<8x256xf32> to vector<1x256xf32>
    %89 = vector.extract_strided_slice %1 {offsets = [5, 0], sizes = [1, 256], strides = [1, 1]} : vector<8x256xf32> to vector<1x256xf32>
    %90 = vector.broadcast %78 : vector<1x256xf32> to vector<64x256xf32>
    %91 = arith.subf %74, %90 : vector<64x256xf32>
    %cst_50 = arith.constant 9.99999974E-6 : f32
    %92 = vector.broadcast %cst_50 : f32 to vector<1x256xf32>
    %93 = arith.addf %87, %92 : vector<1x256xf32>
    %94 = math.rsqrt %93 : vector<1x256xf32>
    %95 = arith.mulf %94, %88 : vector<1x256xf32>
    %96 = vector.broadcast %95 : vector<1x256xf32> to vector<64x256xf32>
    %97 = arith.mulf %91, %96 : vector<64x256xf32>
    %98 = vector.broadcast %89 : vector<1x256xf32> to vector<64x256xf32>
    %99 = arith.addf %97, %98 : vector<64x256xf32>
    %cst_51 = arith.constant 0.000000e+00 : f32
    %100 = vector.broadcast %cst_51 : f32 to vector<64x256xf32>
    %101 = arith.maximumf %99, %100 : vector<64x256xf32>
    %c0_52 = arith.constant 0 : index
    %c0_53 = arith.constant 0 : index
    %102 = vector.load %arg5[%c0_52, %c0_53] : memref<256x128xf32, #tpu.memory_space<vmem>>, vector<256x128xf32>
    %cst_54 = arith.constant dense<0.000000e+00> : vector<64x128xf32>
    %103 = tpu.matmul %101, %102, %cst_54 {dimension_numbers = #tpu.dot_dimension_numbers<[1], [0], [0], [1], [0, 0, 1, 1], [], []>} : vector<64x256xf32>, vector<256x128xf32>, vector<64x128xf32> -> vector<64x128xf32>
    %104 = vector.extract_strided_slice %1 {offsets = [6, 0], sizes = [1, 128], strides = [1, 1]} : vector<8x256xf32> to vector<1x128xf32>
    %105 = vector.broadcast %104 : vector<1x128xf32> to vector<64x128xf32>
    %106 = arith.addf %103, %105 : vector<64x128xf32>
    %cst_55 = arith.constant 0.000000e+00 : f32
    %107 = vector.broadcast %cst_55 : f32 to vector<64x128xf32>
    %108 = arith.maximumf %106, %107 : vector<64x128xf32>
    %109 = vector.extract_strided_slice %1 {offsets = [7, 0], sizes = [1, 128], strides = [1, 1]} : vector<8x256xf32> to vector<1x128xf32>
    %110 = vector.broadcast %109 : vector<1x128xf32> to vector<64x128xf32>
    %111 = arith.mulf %108, %110 : vector<64x128xf32>
    %cst_56 = arith.constant dense<0.000000e+00> : vector<64xf32>
    %112 = vector.multi_reduction <add>, %111, %cst_56 [1] : vector<64x128xf32> to vector<64xf32>
    %113 = vector.shape_cast %112 : vector<64xf32> to vector<64x1xf32>
    %114 = vector.extract_strided_slice %1 {offsets = [7, 128], sizes = [1, 1], strides = [1, 1]} : vector<8x256xf32> to vector<1x1xf32>
    %115 = vector.broadcast %114 : vector<1x1xf32> to vector<64x1xf32>
    %116 = arith.addf %113, %115 : vector<64x1xf32>
    %c0_57 = arith.constant 0 : index
    %c0_58 = arith.constant 0 : index
    %117 = vector.load %arg7[%c0_57, %c0_58] : memref<64x1xf32, #tpu.memory_space<vmem>>, vector<64x1xf32>
    tpu.vector_store %arg7[%c0_57, %c0_58], %116 {strides = array<i32>} : memref<64x1xf32, #tpu.memory_space<vmem>>, vector<64x1xf32>,
    return
  }
}

</mosaic_0001>

<llo_original>
// kernel: tpu_custom_call.1
$region0: #{tpu_custom_call.1}
  #allocation0 [shape = 'u32[]', space=smem, size = 0x4, offset = 0x4, fixed_abs, tag = 'smem constant byte address 0x4 - core index']
  #allocation1 [shape = 'u32[144,128]{1,0:T(1,128)}', space=vmem, size = 0x12000, scoped, tag = 'internal scratch']
  #allocation2 [shape = 'f32[64,256]{1,0:T(8,128)}', space=vmem, size = 0x10000, scoped, tag = 'scratch operand']
  %s0 = inlined_call_operand.vmem [shape: f32[64,6], index: 0, kind: input, shape index: {}]
  %s1 = inlined_call_operand.vmem [shape: f32[64,64], index: 1, kind: input, shape index: {}]
  %s2 = inlined_call_operand.hbm [shape: f32[12,64], index: 2, kind: input, shape index: {}]
  %s3 = inlined_call_operand.hbm [shape: f32[128,128], index: 3, kind: input, shape index: {}]
  %s4 = inlined_call_operand.hbm [shape: f32[256,256], index: 4, kind: input, shape index: {}]
  %s5 = inlined_call_operand.hbm [shape: f32[256,128], index: 5, kind: input, shape index: {}]
  %s6 = inlined_call_operand.vmem [shape: f32[8,256], index: 6, kind: input, shape index: {}]
  %s7 = inlined_call_operand.vmem [shape: f32[64,1], index: 7, kind: output, shape index: {}]
  %s8 = sld [smem:[#allocation0]]
  $region54: #{tpu_custom_call.1} parent=0
    _
  %s10 = ssub.s32 1, %s8
  %s11 = scalar_select 0, %s10, %s8
  $region1: #{tpu_custom_call.1} parent=0
    #allocation3 [shape = 'u8[8192]{0}', space=vmem, size = 0x2000, scoped, tag = 'input window, operand 2, single buffered']
    #allocation4 [shape = 's32[1]{0}', space=sflag, size = 0x4, scoped, tag = 'scoped memory for tpu_custom_call.1']
    #allocation5 [shape = 'u8[65536]{0}', space=vmem, size = 0x10000, scoped, tag = 'input window, operand 3, single buffered']
    #allocation6 [shape = 's32[1]{0}', space=sflag, size = 0x4, scoped, tag = 'scoped memory for tpu_custom_call.1']
    #allocation7 [shape = 'u8[262144]{0}', space=vmem, size = 0x40000, scoped, tag = 'input window, operand 4, single buffered']
    #allocation8 [shape = 'u8[131072]{0}', space=vmem, size = 0x20000, scoped, tag = 'input window, operand 5, single buffered']
    #allocation9 [shape = 's32[1]{0}', space=sflag, size = 0x4, scoped, tag = 'scoped memory for tpu_custom_call.1']
    %12 = vsyncpa [#allocation4], 0
    %13 = vsyncpa [#allocation6], 0
    %14 = vsyncpa [#allocation9], 0
    // Predicated region
    $region2: #{tpu_custom_call.1} parent=1 // pred_check
      _
    $region3: #{tpu_custom_call.1} parent=1 // pred_check_branch
      %16 = sbr.rel (0) target = $region5
    $region4: #{tpu_custom_call.1} parent=1 // pred_region
      _
    $region5: #{tpu_custom_call.1} parent=1 // pred_fallthru
      _
    // Predicated region
    $region6: #{tpu_custom_call.1} parent=1 // pred_check
      _
    $region7: #{tpu_custom_call.1} parent=1 // pred_check_branch
      %18 = sbr.rel (0) target = $region9
    $region8: #{tpu_custom_call.1} parent=1 // pred_region
      _
    $region9: #{tpu_custom_call.1} parent=1 // pred_fallthru
      _
    // Predicated region
    $region10: #{tpu_custom_call.1} parent=1 // pred_check
      _
    $region11: #{tpu_custom_call.1} parent=1 // pred_check_branch
      %20 = sbr.rel (0) target = $region13
    $region12: #{tpu_custom_call.1} parent=1 // pred_region
      %s22 = ssub.s32 256, 256
      %23 = vsyncadd [#allocation4], %s22
      %s24 = sshll.u32 [#allocation3], 4
      %s25 = int_to_ptr.vmem [resolvable:$true] %s24
      %30 = dma.hbm_to_vmem [thread:$0]  %s2, 256, %s25, [#allocation4], 128, 128, 8
    $region13: #{tpu_custom_call.1} parent=1 // pred_fallthru
      _
    // Predicated region
    $region14: #{tpu_custom_call.1} parent=1 // pred_check
      _
    $region15: #{tpu_custom_call.1} parent=1 // pred_check_branch
      %32 = sbr.rel (0) target = $region17
    $region16: #{tpu_custom_call.1} parent=1 // pred_region
      %s34 = ssub.s32 2048, 2048
      %35 = vsyncadd [#allocation6], %s34
      %s36 = sshll.u32 [#allocation5], 4
      %s37 = int_to_ptr.vmem [resolvable:$true] %s36
      %42 = dma.hbm_to_vmem [thread:$0]  %s3, 2048, %s37, [#allocation6], 128, 128, 8
    $region17: #{tpu_custom_call.1} parent=1 // pred_fallthru
      _
    // Predicated region
    $region18: #{tpu_custom_call.1} parent=1 // pred_check
      _
    $region19: #{tpu_custom_call.1} parent=1 // pred_check_branch
      %44 = sbr.rel (0) target = $region21
    $region20: #{tpu_custom_call.1} parent=1 // pred_region
      %s46 = ssub.s32 8192, 8192
      %47 = vsyncadd [#allocation6], %s46
      %s48 = sshll.u32 [#allocation7], 4
      %s49 = int_to_ptr.vmem [resolvable:$true] %s48
      %54 = dma.hbm_to_vmem [thread:$0]  %s4, 8192, %s49, [#allocation6], 256, 256, 16
    $region21: #{tpu_custom_call.1} parent=1 // pred_fallthru
      _
    // Predicated region
    $region22: #{tpu_custom_call.1} parent=1 // pred_check
      _
    $region23: #{tpu_custom_call.1} parent=1 // pred_check_branch
      %56 = sbr.rel (0) target = $region25
    $region24: #{tpu_custom_call.1} parent=1 // pred_region
      %s58 = ssub.s32 4096, 4096
      %59 = vsyncadd [#allocation9], %s58
      %s60 = sshll.u32 [#allocation8], 4
      %s61 = int_to_ptr.vmem [resolvable:$true] %s60
      %66 = dma.hbm_to_vmem [thread:$0]  %s5, 4096, %s61, [#allocation9], 128, 128, 8
    $region25: #{tpu_custom_call.1} parent=1 // pred_fallthru
      _
    // Predicated region
    $region26: #{tpu_custom_call.1} parent=1 // pred_check
      _
    $region27: #{tpu_custom_call.1} parent=1 // pred_check_branch
      %68 = sbr.rel (0) target = $region29
    $region28: #{tpu_custom_call.1} parent=1 // pred_region
      _
    $region29: #{tpu_custom_call.1} parent=1 // pred_fallthru
      _
    // Predicated region
    $region30: #{tpu_custom_call.1} parent=1 // pred_check
      _
    $region31: #{tpu_custom_call.1} parent=1 // pred_check_branch
      %70 = sbr.rel (0) target = $region33
    $region32: #{tpu_custom_call.1} parent=1 // pred_region
      %71 = dma.done [#allocation4], 256
    $region33: #{tpu_custom_call.1} parent=1 // pred_fallthru
      _
    // Predicated region
    $region34: #{tpu_custom_call.1} parent=1 // pred_check
      _
    $region35: #{tpu_custom_call.1} parent=1 // pred_check_branch
      %73 = sbr.rel (0) target = $region37
    $region36: #{tpu_custom_call.1} parent=1 // pred_region
      %74 = dma.done [#allocation6], 2048
    $region37: #{tpu_custom_call.1} parent=1 // pred_fallthru
      _
    // Predicated region
    $region38: #{tpu_custom_call.1} parent=1 // pred_check
      _
    $region39: #{tpu_custom_call.1} parent=1 // pred_check_branch
      %76 = sbr.rel (0) target = $region41
    $region40: #{tpu_custom_call.1} parent=1 // pred_region
      %77 = dma.done [#allocation6], 8192
    $region41: #{tpu_custom_call.1} parent=1 // pred_fallthru
      _
    // Predicated region
    $region42: #{tpu_custom_call.1} parent=1 // pred_check
      _
    $region43: #{tpu_custom_call.1} parent=1 // pred_check_branch
      %79 = sbr.rel (0) target = $region45
    $region44: #{tpu_custom_call.1} parent=1 // pred_region
      %80 = dma.done [#allocation9], 4096
    $region45: #{tpu_custom_call.1} parent=1 // pred_fallthru
      _
    %v81 = vld [vmem:[%s1] sm:$0xff]
    %v82 = vld [vmem:[%s1 + $0x8] sm:$0xff]
    %v83 = vld [vmem:[%s1 + $0x10] sm:$0xff]
    %v84 = vld [vmem:[%s1 + $0x18] sm:$0xff]
    %v85 = vld [vmem:[%s1 + $0x20] sm:$0xff]
    %v86 = vld [vmem:[%s1 + $0x28] sm:$0xff]
    %v87 = vld [vmem:[%s1 + $0x30] sm:$0xff]
    %v88 = vld [vmem:[%s1 + $0x38] sm:$0xff]
    %v89 = vld [vmem:[%s6] sm:$0xff]
    %v90 = vld [vmem:[%s6 + $0x8] sm:$0xff]
    %v91 = vld [vmem:[%s0] sm:$0xff]
    %v92 = vld [vmem:[%s0 + $0x8] sm:$0xff]
    %v93 = vld [vmem:[%s0 + $0x10] sm:$0xff]
    %v94 = vld [vmem:[%s0 + $0x18] sm:$0xff]
    %v95 = vld [vmem:[%s0 + $0x20] sm:$0xff]
    %v96 = vld [vmem:[%s0 + $0x28] sm:$0xff]
    %v97 = vld [vmem:[%s0 + $0x30] sm:$0xff]
    %v98 = vld [vmem:[%s0 + $0x38] sm:$0xff]
    %vm99 = vcmask 523264
    %v101 = vsel %vm99, %v81, 0
    %v104 = vsel %vm99, %v82, 0
    %v107 = vsel %vm99, %v83, 0
    %v110 = vsel %vm99, %v84, 0
    %v113 = vsel %vm99, %v85, 0
    %v116 = vsel %vm99, %v86, 0
    %v119 = vsel %vm99, %v87, 0
    %v122 = vsel %vm99, %v88, 0
    %124 = vmatprep.subr.mxu0 0.0
    %125 = vmatpush1.msra.mxu0 %v91
    %126 = vmatprep.subr.mxu0 0.0
    %127 = vmatpush1.msra.mxu0 %v92
    %128 = vmatprep.subr.mxu0 0.0
    %129 = vmatpush1.msra.mxu0 %v93
    %130 = vmatprep.subr.mxu0 0.0
    %131 = vmatpush1.msra.mxu0 %v94
    %132 = vmatprep.subr.mxu0 0.0
    %133 = vmatpush1.msra.mxu0 %v95
    %134 = vmatprep.subr.mxu0 0.0
    %135 = vmatpush1.msra.mxu0 %v96
    %136 = vmatprep.subr.mxu0 0.0
    %137 = vmatpush1.msra.mxu0 %v97
    %138 = vmatprep.subr.mxu0 0.0
    %139 = vmatpush1.msra.mxu0 %v98
    %140 = vmatprep.subr.mxu0 0.0
    %141 = vmatpush1.msra.mxu0 0.0
    %142 = vmatprep.subr.mxu0 0.0
    %143 = vmatpush1.msra.mxu0 0.0
    %144 = vmatprep.subr.mxu0 0.0
    %145 = vmatpush1.msra.mxu0 0.0
    %146 = vmatprep.subr.mxu0 0.0
    %147 = vmatpush1.msra.mxu0 0.0
    %148 = vmatprep.subr.mxu0 0.0
    %149 = vmatpush1.msra.mxu0 0.0
    %150 = vmatprep.subr.mxu0 0.0
    %151 = vmatpush1.msra.mxu0 0.0
    %152 = vmatprep.subr.mxu0 0.0
    %153 = vmatpush1.msra.mxu0 0.0
    %154 = vmatprep.subr.mxu0 0.0
    %155 = vmatpush1.msra.mxu0 0.0
    %156 = vmatprep.subr.mxu0 0.0
    %157 = vmatpush1.msra.mxu0 0.0
    %158 = vmatprep.subr.mxu0 0.0
    %159 = vmatpush1.msra.mxu0 0.0
    %160 = vmatprep.subr.mxu0 0.0
    %161 = vmatpush1.msra.mxu0 0.0
    %162 = vmatprep.subr.mxu0 0.0
    %163 = vmatpush1.msra.mxu0 0.0
    %164 = vmatprep.subr.mxu0 0.0
    %165 = vmatpush1.msra.mxu0 0.0
    %166 = vmatprep.subr.mxu0 0.0
    %167 = vmatpush1.msra.mxu0 0.0
    %168 = vmatprep.subr.mxu0 0.0
    %169 = vmatpush1.msra.mxu0 0.0
    %170 = vmatprep.subr.mxu0 0.0
    %171 = vmatpush1.msra.mxu0 0.0
    %172 = vmatprep.subr.mxu0 0.0
    %173 = vmatpush1.msra.mxu0 0.0
    %174 = vmatprep.subr.mxu0 0.0
    %175 = vmatpush1.msra.mxu0 0.0
    %176 = vmatprep.subr.mxu0 0.0
    %177 = vmatpush1.msra.mxu0 0.0
    %178 = vmatprep.subr.mxu0 0.0
    %179 = vmatpush1.msra.mxu0 0.0
    %180 = vmatprep.subr.mxu0 0.0
    %181 = vmatpush1.msra.mxu0 0.0
    %182 = vmatprep.subr.mxu0 0.0
    %183 = vmatpush1.msra.mxu0 0.0
    %184 = vmatprep.subr.mxu0 0.0
    %185 = vmatpush1.msra.mxu0 0.0
    %186 = vmatprep.subr.mxu0 0.0
    %187 = vmatpush1.msra.mxu0 0.0
    %188 = vmatprep.mubr.f32.mxu0 0.0
    %189 = vmatmul.mubr.f32.gmra.mrb[0].mxu0 %v101
    %v190 = vpop.f32.mrb[0].mxu0
    %v191 = vadd.f32 0.0, %v190
    %v192 = vpop.f32.mrb[0].mxu0
    %193 = vmatprep.mubr.f32.mxu0 0.0
    %194 = vmatmul.mubr.f32.gmra.mrb[0].mxu0 %v104
    %v195 = vpop.f32.mrb[0].mxu0
    %v196 = vadd.f32 0.0, %v195
    %v197 = vpop.f32.mrb[0].mxu0
    %198 = vmatprep.mubr.f32.mxu0 0.0
    %199 = vmatmul.mubr.f32.gmra.mrb[0].mxu0 %v107
    %v200 = vpop.f32.mrb[0].mxu0
    %v201 = vadd.f32 0.0, %v200
    %v202 = vpop.f32.mrb[0].mxu0
    %203 = vmatprep.mubr.f32.mxu0 0.0
    %204 = vmatmul.mubr.f32.gmra.mrb[0].mxu0 %v110
    %v205 = vpop.f32.mrb[0].mxu0
    %v206 = vadd.f32 0.0, %v205
    %v207 = vpop.f32.mrb[0].mxu0
    %208 = vmatprep.mubr.f32.mxu0 0.0
    %209 = vmatmul.mubr.f32.gmra.mrb[0].mxu0 %v113
    %v210 = vpop.f32.mrb[0].mxu0
    %v211 = vadd.f32 0.0, %v210
    %v212 = vpop.f32.mrb[0].mxu0
    %213 = vmatprep.mubr.f32.mxu0 0.0
    %214 = vmatmul.mubr.f32.gmra.mrb[0].mxu0 %v116
    %v215 = vpop.f32.mrb[0].mxu0
    %v216 = vadd.f32 0.0, %v215
    %v217 = vpop.f32.mrb[0].mxu0
    %218 = vmatprep.mubr.f32.mxu0 0.0
    %219 = vmatmul.mubr.f32.gmra.mrb[0].mxu0 %v119
    %v220 = vpop.f32.mrb[0].mxu0
    %v221 = vadd.f32 0.0, %v220
    %v222 = vpop.f32.mrb[0].mxu0
    %223 = vmatprep.mubr.f32.mxu0 0.0
    %224 = vmatmul.mubr.f32.gmra.mrb[0].mxu0 %v122
    %v225 = vpop.f32.mrb[0].mxu0
    %v226 = vadd.f32 0.0, %v225
    %v227 = vpop.f32.mrb[0].mxu0
    %228 = vdwg.mxu0
    %vm229 = vcmask 48128
    %230 = vst.msk [vmem:[#allocation2] sm:$0xff] %vm229, %v91
    %231 = vst.msk [vmem:[#allocation2 + $0x10] sm:$0xff] %vm229, %v92
    %232 = vst.msk [vmem:[#allocation2 + $0x20] sm:$0xff] %vm229, %v93
    %233 = vst.msk [vmem:[#allocation2 + $0x30] sm:$0xff] %vm229, %v94
    %234 = vst.msk [vmem:[#allocation2 + $0x40] sm:$0xff] %vm229, %v95
    %235 = vst.msk [vmem:[#allocation2 + $0x50] sm:$0xff] %vm229, %v96
    %236 = vst.msk [vmem:[#allocation2 + $0x60] sm:$0xff] %vm229, %v97
    %237 = vst.msk [vmem:[#allocation2 + $0x70] sm:$0xff] %vm229, %v98
    %246 = vrot.lane.b32.xlu0 %v191, 6
    %v247 = vpop.permute.xlu0 %246
    %248 = vrot.lane.b32.xlu0 %v196, 6
    %v249 = vpop.permute.xlu0 %248
    %250 = vrot.lane.b32.xlu0 %v201, 6
    %v251 = vpop.permute.xlu0 %250
    %252 = vrot.lane.b32.xlu0 %v206, 6
    %v253 = vpop.permute.xlu0 %252
    %254 = vrot.lane.b32.xlu0 %v211, 6
    %v255 = vpop.permute.xlu0 %254
    %256 = vrot.lane.b32.xlu0 %v216, 6
    %v257 = vpop.permute.xlu0 %256
    %258 = vrot.lane.b32.xlu0 %v221, 6
    %v259 = vpop.permute.xlu0 %258
    %260 = vrot.lane.b32.xlu0 %v226, 6
    %v261 = vpop.permute.xlu0 %260
    %vm270 = vcmask 97328
    %271 = vst.msk [vmem:[#allocation2] sm:$0xff] %vm270, %v247
    %272 = vst.msk [vmem:[#allocation2 + $0x10] sm:$0xff] %vm270, %v249
    %273 = vst.msk [vmem:[#allocation2 + $0x20] sm:$0xff] %vm270, %v251
    %274 = vst.msk [vmem:[#allocation2 + $0x30] sm:$0xff] %vm270, %v253
    %275 = vst.msk [vmem:[#allocation2 + $0x40] sm:$0xff] %vm270, %v255
    %276 = vst.msk [vmem:[#allocation2 + $0x50] sm:$0xff] %vm270, %v257
    %277 = vst.msk [vmem:[#allocation2 + $0x60] sm:$0xff] %vm270, %v259
    %278 = vst.msk [vmem:[#allocation2 + $0x70] sm:$0xff] %vm270, %v261
    %v279 = vld [vmem:[#allocation2] sm:$0xff]
    %v280 = vld [vmem:[#allocation2 + $0x10] sm:$0xff]
    %v281 = vld [vmem:[#allocation2 + $0x20] sm:$0xff]
    %v282 = vld [vmem:[#allocation2 + $0x30] sm:$0xff]
    %v283 = vld [vmem:[#allocation2 + $0x40] sm:$0xff]
    %v284 = vld [vmem:[#allocation2 + $0x50] sm:$0xff]
    %v285 = vld [vmem:[#allocation2 + $0x60] sm:$0xff]
    %v286 = vld [vmem:[#allocation2 + $0x70] sm:$0xff]
    %v287 = vld [vmem:[#allocation3] sm:$0xff]
    %v288 = vld [vmem:[#allocation3 + $0x8] sm:$0xf]
    %vm289 = vcmask 97280
    %v291 = vsel %vm289, %v279, 0
    %v294 = vsel %vm289, %v280, 0
    %v297 = vsel %vm289, %v281, 0
    %v300 = vsel %vm289, %v282, 0
    %v303 = vsel %vm289, %v283, 0
    %v306 = vsel %vm289, %v284, 0
    %v309 = vsel %vm289, %v285, 0
    %v312 = vsel %vm289, %v286, 0
    %vm314 = vcmask 1043456
    %v316 = vsel %vm314, %v288, 0
    %318 = vmatprep.subr.mxu0 0.0
    %319 = vmatpush1.msra.mxu0 %v287
    %320 = vmatprep.subr.mxu0 0.0
    %321 = vmatpush1.msra.mxu0 %v316
    %322 = vmatprep.subr.mxu0 0.0
    %323 = vmatpush1.msra.mxu0 0.0
    %324 = vmatprep.subr.mxu0 0.0
    %325 = vmatpush1.msra.mxu0 0.0
    %326 = vmatprep.subr.mxu0 0.0
    %327 = vmatpush1.msra.mxu0 0.0
    %328 = vmatprep.subr.mxu0 0.0
    %329 = vmatpush1.msra.mxu0 0.0
    %330 = vmatprep.subr.mxu0 0.0
    %331 = vmatpush1.msra.mxu0 0.0
    %332 = vmatprep.subr.mxu0 0.0
    %333 = vmatpush1.msra.mxu0 0.0
    %334 = vmatprep.subr.mxu0 0.0
    %335 = vmatpush1.msra.mxu0 0.0
    %336 = vmatprep.subr.mxu0 0.0
    %337 = vmatpush1.msra.mxu0 0.0
    %338 = vmatprep.subr.mxu0 0.0
    %339 = vmatpush1.msra.mxu0 0.0
    %340 = vmatprep.subr.mxu0 0.0
    %341 = vmatpush1.msra.mxu0 0.0
    %342 = vmatprep.subr.mxu0 0.0
    %343 = vmatpush1.msra.mxu0 0.0
    %344 = vmatprep.subr.mxu0 0.0
    %345 = vmatpush1.msra.mxu0 0.0
    %346 = vmatprep.subr.mxu0 0.0
    %347 = vmatpush1.msra.mxu0 0.0
    %348 = vmatprep.subr.mxu0 0.0
    %349 = vmatpush1.msra.mxu0 0.0
    %350 = vmatprep.subr.mxu0 0.0
    %351 = vmatpush1.msra.mxu0 0.0
    %352 = vmatprep.subr.mxu0 0.0
    %353 = vmatpush1.msra.mxu0 0.0
    %354 = vmatprep.subr.mxu0 0.0
    %355 = vmatpush1.msra.mxu0 0.0
    %356 = vmatprep.subr.mxu0 0.0
    %357 = vmatpush1.msra.mxu0 0.0
    %358 = vmatprep.subr.mxu0 0.0
    %359 = vmatpush1.msra.mxu0 0.0
    %360 = vmatprep.subr.mxu0 0.0
    %361 = vmatpush1.msra.mxu0 0.0
    %362 = vmatprep.subr.mxu0 0.0
    %363 = vmatpush1.msra.mxu0 0.0
    %364 = vmatprep.subr.mxu0 0.0
    %365 = vmatpush1.msra.mxu0 0.0
    %366 = vmatprep.subr.mxu0 0.0
    %367 = vmatpush1.msra.mxu0 0.0
    %368 = vmatprep.subr.mxu0 0.0
    %369 = vmatpush1.msra.mxu0 0.0
    %370 = vmatprep.subr.mxu0 0.0
    %371 = vmatpush1.msra.mxu0 0.0
    %372 = vmatprep.subr.mxu0 0.0
    %373 = vmatpush1.msra.mxu0 0.0
    %374 = vmatprep.subr.mxu0 0.0
    %375 = vmatpush1.msra.mxu0 0.0
    %376 = vmatprep.subr.mxu0 0.0
    %377 = vmatpush1.msra.mxu0 0.0
    %378 = vmatprep.subr.mxu0 0.0
    %379 = vmatpush1.msra.mxu0 0.0
    %380 = vmatprep.subr.mxu0 0.0
    %381 = vmatpush1.msra.mxu0 0.0
    %382 = vmatprep.mubr.f32.mxu0 0.0
    %383 = vmatmul.mubr.f32.gmra.mrb[0].mxu0 %v291
    %v384 = vpop.f32.mrb[0].mxu0
    %v385 = vadd.f32 0.0, %v384
    %v386 = vpop.f32.mrb[0].mxu0
    %387 = vmatprep.mubr.f32.mxu0 0.0
    %388 = vmatmul.mubr.f32.gmra.mrb[0].mxu0 %v294
    %v389 = vpop.f32.mrb[0].mxu0
    %v390 = vadd.f32 0.0, %v389
    %v391 = vpop.f32.mrb[0].mxu0
    %392 = vmatprep.mubr.f32.mxu0 0.0
    %393 = vmatmul.mubr.f32.gmra.mrb[0].mxu0 %v297
    %v394 = vpop.f32.mrb[0].mxu0
    %v395 = vadd.f32 0.0, %v394
    %v396 = vpop.f32.mrb[0].mxu0
    %397 = vmatprep.mubr.f32.mxu0 0.0
    %398 = vmatmul.mubr.f32.gmra.mrb[0].mxu0 %v300
    %v399 = vpop.f32.mrb[0].mxu0
    %v400 = vadd.f32 0.0, %v399
    %v401 = vpop.f32.mrb[0].mxu0
    %402 = vmatprep.mubr.f32.mxu0 0.0
    %403 = vmatmul.mubr.f32.gmra.mrb[0].mxu0 %v303
    %v404 = vpop.f32.mrb[0].mxu0
    %v405 = vadd.f32 0.0, %v404
    %v406 = vpop.f32.mrb[0].mxu0
    %407 = vmatprep.mubr.f32.mxu0 0.0
    %408 = vmatmul.mubr.f32.gmra.mrb[0].mxu0 %v306
    %v409 = vpop.f32.mrb[0].mxu0
    %v410 = vadd.f32 0.0, %v409
    %v411 = vpop.f32.mrb[0].mxu0
    %412 = vmatprep.mubr.f32.mxu0 0.0
    %413 = vmatmul.mubr.f32.gmra.mrb[0].mxu0 %v309
    %v414 = vpop.f32.mrb[0].mxu0
    %v415 = vadd.f32 0.0, %v414
    %v416 = vpop.f32.mrb[0].mxu0
    %417 = vmatprep.mubr.f32.mxu0 0.0
    %418 = vmatmul.mubr.f32.gmra.mrb[0].mxu0 %v312
    %v419 = vpop.f32.mrb[0].mxu0
    %v420 = vadd.f32 0.0, %v419
    %v421 = vpop.f32.mrb[0].mxu0
    %422 = vdwg.mxu0
    %v423 = vsel %vm99, %v385, 0.0
    %v424 = vsel %vm99, %v390, 0.0
    %v425 = vadd.f32 %v423, %v424
    %v426 = vsel %vm99, %v395, 0.0
    %v427 = vadd.f32 %v425, %v426
    %v428 = vsel %vm99, %v400, 0.0
    %v429 = vadd.f32 %v427, %v428
    %v430 = vsel %vm99, %v405, 0.0
    %v431 = vadd.f32 %v429, %v430
    %v432 = vsel %vm99, %v410, 0.0
    %v433 = vadd.f32 %v431, %v432
    %v434 = vsel %vm99, %v415, 0.0
    %v435 = vadd.f32 %v433, %v434
    %v436 = vsel %vm99, %v420, 0.0
    %v437 = vadd.f32 %v435, %v436
    %v438 = vrot.slane %v437, 4
    %v439 = vadd.f32 %v437, %v438
    %v440 = vrot.slane %v439, 2
    %v441 = vadd.f32 %v439, %v440
    %v442 = vrot.slane %v441, 1
    %v443 = vadd.f32 %v441, %v442
    %v444 = vrcp.pop 64.0
    %v445 = vmul.f32 %v443, %v444
    %v446 = vmul.f32 %v385, %v385
    %v447 = vmul.f32 %v390, %v390
    %v448 = vmul.f32 %v395, %v395
    %v449 = vmul.f32 %v400, %v400
    %v450 = vmul.f32 %v405, %v405
    %v451 = vmul.f32 %v410, %v410
    %v452 = vmul.f32 %v415, %v415
    %v453 = vmul.f32 %v420, %v420
    %v454 = vsel %vm99, %v446, 0.0
    %v455 = vsel %vm99, %v447, 0.0
    %v456 = vadd.f32 %v454, %v455
    %v457 = vsel %vm99, %v448, 0.0
    %v458 = vadd.f32 %v456, %v457
    %v459 = vsel %vm99, %v449, 0.0
    %v460 = vadd.f32 %v458, %v459
    %v461 = vsel %vm99, %v450, 0.0
    %v462 = vadd.f32 %v460, %v461
    %v463 = vsel %vm99, %v451, 0.0
    %v464 = vadd.f32 %v462, %v463
    %v465 = vsel %vm99, %v452, 0.0
    %v466 = vadd.f32 %v464, %v465
    %v467 = vsel %vm99, %v453, 0.0
    %v468 = vadd.f32 %v466, %v467
    %v469 = vrot.slane %v468, 4
    %v470 = vadd.f32 %v468, %v469
    %v471 = vrot.slane %v470, 2
    %v472 = vadd.f32 %v470, %v471
    %v473 = vrot.slane %v472, 1
    %v474 = vadd.f32 %v472, %v473
    %v475 = vmul.f32 %v474, %v444
    %v476 = vmul.f32 %v445, %v445
    %v477 = vsub.f32 %v475, %v476
    %v478 = vmax.f32 %v477, 0.0
    %v479 = vsub.f32 %v385, %v445
    %v480 = vsub.f32 %v390, %v445
    %v481 = vsub.f32 %v395, %v445
    %v482 = vsub.f32 %v400, %v445
    %v483 = vsub.f32 %v405, %v445
    %v484 = vsub.f32 %v410, %v445
    %v485 = vsub.f32 %v415, %v445
    %v486 = vsub.f32 %v420, %v445
    %v487 = vadd.f32 %v478, 1e-05
    %v488 = vrsqrt.pop %v487
    %v489 = vmul.f32 %v488, %v89
    %v490 = vlaneseq
    %v491 = vshrl.u32 %v490, 7
    %v492 = vsub.s32 0, %v491
    %v493 = vrot.slane %v489, %v492
    %v494 = vmul.f32 %v479, %v493
    %v495 = vmul.f32 %v480, %v493
    %v496 = vmul.f32 %v481, %v493
    %v497 = vmul.f32 %v482, %v493
    %v498 = vmul.f32 %v483, %v493
    %v499 = vmul.f32 %v484, %v493
    %v500 = vmul.f32 %v485, %v493
    %v501 = vmul.f32 %v486, %v493
    %v502 = vlaneseq
    %v503 = vshrl.u32 %v502, 7
    %v504 = vsub.s32 1, %v503
    %v505 = vrot.slane %v89, %v504
    %v506 = vadd.f32 %v494, %v505
    %v507 = vadd.f32 %v495, %v505
    %v508 = vadd.f32 %v496, %v505
    %v509 = vadd.f32 %v497, %v505
    %v510 = vadd.f32 %v498, %v505
    %v511 = vadd.f32 %v499, %v505
    %v512 = vadd.f32 %v500, %v505
    %v513 = vadd.f32 %v501, %v505
    %v514 = vmax.f32 %v506, 0.0
    %v515 = vmax.f32 %v507, 0.0
    %v516 = vmax.f32 %v508, 0.0
    %v517 = vmax.f32 %v509, 0.0
    %v518 = vmax.f32 %v510, 0.0
    %v519 = vmax.f32 %v511, 0.0
    %v520 = vmax.f32 %v512, 0.0
    %v521 = vmax.f32 %v513, 0.0
    %522 = vmatprep.subr.mxu0 0.0
    %523 = vmatpush1.msra.mxu0 %v514
    %524 = vmatprep.subr.mxu0 0.0
    %525 = vmatpush1.msra.mxu0 %v515
    %526 = vmatprep.subr.mxu0 0.0
    %527 = vmatpush1.msra.mxu0 %v516
    %528 = vmatprep.subr.mxu0 0.0
    %529 = vmatpush1.msra.mxu0 %v517
    %530 = vmatprep.subr.mxu0 0.0
    %531 = vmatpush1.msra.mxu0 %v518
    %532 = vmatprep.subr.mxu0 0.0
    %533 = vmatpush1.msra.mxu0 %v519
    %534 = vmatprep.subr.mxu0 0.0
    %535 = vmatpush1.msra.mxu0 %v520
    %536 = vmatprep.subr.mxu0 0.0
    %537 = vmatpush1.msra.mxu0 %v521
    %538 = vmatprep.subr.mxu0 0.0
    %539 = vmatpush1.msra.mxu0 0.0
    %540 = vmatprep.subr.mxu0 0.0
    %541 = vmatpush1.msra.mxu0 0.0
    %542 = vmatprep.subr.mxu0 0.0
    %543 = vmatpush1.msra.mxu0 0.0
    %544 = vmatprep.subr.mxu0 0.0
    %545 = vmatpush1.msra.mxu0 0.0
    %546 = vmatprep.subr.mxu0 0.0
    %547 = vmatpush1.msra.mxu0 0.0
    %548 = vmatprep.subr.mxu0 0.0
    %549 = vmatpush1.msra.mxu0 0.0
    %550 = vmatprep.subr.mxu0 0.0
    %551 = vmatpush1.msra.mxu0 0.0
    %552 = vmatprep.subr.mxu0 0.0
    %553 = vmatpush1.msra.mxu0 0.0
    %554 = vmatprep.subr.mxu0 0.0
    %555 = vmatpush1.msra.mxu0 0.0
    %556 = vmatprep.subr.mxu0 0.0
    %557 = vmatpush1.msra.mxu0 0.0
    %558 = vmatprep.subr.mxu0 0.0
    %559 = vmatpush1.msra.mxu0 0.0
    %560 = vmatprep.subr.mxu0 0.0
    %561 = vmatpush1.msra.mxu0 0.0
    %562 = vmatprep.subr.mxu0 0.0
    %563 = vmatpush1.msra.mxu0 0.0
    %564 = vmatprep.subr.mxu0 0.0
    %565 = vmatpush1.msra.mxu0 0.0
    %566 = vmatprep.subr.mxu0 0.0
    %567 = vmatpush1.msra.mxu0 0.0
    %568 = vmatprep.subr.mxu0 0.0
    %569 = vmatpush1.msra.mxu0 0.0
    %570 = vmatprep.subr.mxu0 0.0
    %571 = vmatpush1.msra.mxu0 0.0
    %572 = vmatprep.subr.mxu0 0.0
    %573 = vmatpush1.msra.mxu0 0.0
    %574 = vmatprep.subr.mxu0 0.0
    %575 = vmatpush1.msra.mxu0 0.0
    %576 = vmatprep.subr.mxu0 0.0
    %577 = vmatpush1.msra.mxu0 0.0
    %578 = vmatprep.subr.mxu0 0.0
    %579 = vmatpush1.msra.mxu0 0.0
    %580 = vmatprep.subr.mxu0 0.0
    %581 = vmatpush1.msra.mxu0 0.0
    %582 = vmatprep.subr.mxu0 0.0
    %583 = vmatpush1.msra.mxu0 0.0
    %584 = vmatprep.subr.mxu0 0.0
    %585 = vmatpush1.msra.mxu0 0.0
    %586 = vmatprep.mubr.f32.mxu0 0.0
    %587 = vmatmul.mubr.f32.gmra.mrb[0].mxu0 %v101
    %v588 = vpop.f32.mrb[0].mxu0
    %v589 = vadd.f32 0.0, %v588
    %v590 = vpop.f32.mrb[0].mxu0
    %591 = vmatprep.mubr.f32.mxu0 0.0
    %592 = vmatmul.mubr.f32.gmra.mrb[0].mxu0 %v104
    %v593 = vpop.f32.mrb[0].mxu0
    %v594 = vadd.f32 0.0, %v593
    %v595 = vpop.f32.mrb[0].mxu0
    %596 = vmatprep.mubr.f32.mxu0 0.0
    %597 = vmatmul.mubr.f32.gmra.mrb[0].mxu0 %v107
    %v598 = vpop.f32.mrb[0].mxu0
    %v599 = vadd.f32 0.0, %v598
    %v600 = vpop.f32.mrb[0].mxu0
    %601 = vmatprep.mubr.f32.mxu0 0.0
    %602 = vmatmul.mubr.f32.gmra.mrb[0].mxu0 %v110
    %v603 = vpop.f32.mrb[0].mxu0
    %v604 = vadd.f32 0.0, %v603
    %v605 = vpop.f32.mrb[0].mxu0
    %606 = vmatprep.mubr.f32.mxu0 0.0
    %607 = vmatmul.mubr.f32.gmra.mrb[0].mxu0 %v113
    %v608 = vpop.f32.mrb[0].mxu0
    %v609 = vadd.f32 0.0, %v608
    %v610 = vpop.f32.mrb[0].mxu0
    %611 = vmatprep.mubr.f32.mxu0 0.0
    %612 = vmatmul.mubr.f32.gmra.mrb[0].mxu0 %v116
    %v613 = vpop.f32.mrb[0].mxu0
    %v614 = vadd.f32 0.0, %v613
    %v615 = vpop.f32.mrb[0].mxu0
    %616 = vmatprep.mubr.f32.mxu0 0.0
    %617 = vmatmul.mubr.f32.gmra.mrb[0].mxu0 %v119
    %v618 = vpop.f32.mrb[0].mxu0
    %v619 = vadd.f32 0.0, %v618
    %v620 = vpop.f32.mrb[0].mxu0
    %621 = vmatprep.mubr.f32.mxu0 0.0
    %622 = vmatmul.mubr.f32.gmra.mrb[0].mxu0 %v122
    %v623 = vpop.f32.mrb[0].mxu0
    %v624 = vadd.f32 0.0, %v623
    %v625 = vpop.f32.mrb[0].mxu0
    %626 = vdwg.mxu0
    %627 = vst.msk [vmem:[#allocation2] sm:$0xff] %vm99, %v514
    %628 = vst.msk [vmem:[#allocation2 + $0x10] sm:$0xff] %vm99, %v515
    %629 = vst.msk [vmem:[#allocation2 + $0x20] sm:$0xff] %vm99, %v516
    %630 = vst.msk [vmem:[#allocation2 + $0x30] sm:$0xff] %vm99, %v517
    %631 = vst.msk [vmem:[#allocation2 + $0x40] sm:$0xff] %vm99, %v518
    %632 = vst.msk [vmem:[#allocation2 + $0x50] sm:$0xff] %vm99, %v519
    %633 = vst.msk [vmem:[#allocation2 + $0x60] sm:$0xff] %vm99, %v520
    %634 = vst.msk [vmem:[#allocation2 + $0x70] sm:$0xff] %vm99, %v521
    %643 = vrot.lane.b32.xlu0 %v589, 64
    %v644 = vpop.permute.xlu0 %643
    %645 = vrot.lane.b32.xlu0 %v594, 64
    %v646 = vpop.permute.xlu0 %645
    %647 = vrot.lane.b32.xlu0 %v599, 64
    %v648 = vpop.permute.xlu0 %647
    %649 = vrot.lane.b32.xlu0 %v604, 64
    %v650 = vpop.permute.xlu0 %649
    %651 = vrot.lane.b32.xlu0 %v609, 64
    %v652 = vpop.permute.xlu0 %651
    %653 = vrot.lane.b32.xlu0 %v614, 64
    %v654 = vpop.permute.xlu0 %653
    %655 = vrot.lane.b32.xlu0 %v619, 64
    %v656 = vpop.permute.xlu0 %655
    %657 = vrot.lane.b32.xlu0 %v624, 64
    %v658 = vpop.permute.xlu0 %657
    %vm667 = vcmask 1048064
    %668 = vst.msk [vmem:[#allocation2] sm:$0xff] %vm667, %v644
    %669 = vst.msk [vmem:[#allocation2 + $0x10] sm:$0xff] %vm667, %v646
    %670 = vst.msk [vmem:[#allocation2 + $0x20] sm:$0xff] %vm667, %v648
    %671 = vst.msk [vmem:[#allocation2 + $0x30] sm:$0xff] %vm667, %v650
    %672 = vst.msk [vmem:[#allocation2 + $0x40] sm:$0xff] %vm667, %v652
    %673 = vst.msk [vmem:[#allocation2 + $0x50] sm:$0xff] %vm667, %v654
    %674 = vst.msk [vmem:[#allocation2 + $0x60] sm:$0xff] %vm667, %v656
    %675 = vst.msk [vmem:[#allocation2 + $0x70] sm:$0xff] %vm667, %v658
    %v676 = vld [vmem:[#allocation2] sm:$0xff]
    %v677 = vld [vmem:[#allocation2 + $0x10] sm:$0xff]
    %v678 = vld [vmem:[#allocation2 + $0x20] sm:$0xff]
    %v679 = vld [vmem:[#allocation2 + $0x30] sm:$0xff]
    %v680 = vld [vmem:[#allocation2 + $0x40] sm:$0xff]
    %v681 = vld [vmem:[#allocation2 + $0x50] sm:$0xff]
    %v682 = vld [vmem:[#allocation2 + $0x60] sm:$0xff]
    %v683 = vld [vmem:[#allocation2 + $0x70] sm:$0xff]
    %v684 = vld [vmem:[#allocation5] sm:$0xff]
    %v685 = vld [vmem:[#allocation5 + $0x8] sm:$0xff]
    %v686 = vld [vmem:[#allocation5 + $0x10] sm:$0xff]
    %v687 = vld [vmem:[#allocation5 + $0x18] sm:$0xff]
    %v688 = vld [vmem:[#allocation5 + $0x20] sm:$0xff]
    %v689 = vld [vmem:[#allocation5 + $0x28] sm:$0xff]
    %v690 = vld [vmem:[#allocation5 + $0x30] sm:$0xff]
    %v691 = vld [vmem:[#allocation5 + $0x38] sm:$0xff]
    %v692 = vld [vmem:[#allocation5 + $0x40] sm:$0xff]
    %v693 = vld [vmem:[#allocation5 + $0x48] sm:$0xff]
    %v694 = vld [vmem:[#allocation5 + $0x50] sm:$0xff]
    %v695 = vld [vmem:[#allocation5 + $0x58] sm:$0xff]
    %v696 = vld [vmem:[#allocation5 + $0x60] sm:$0xff]
    %v697 = vld [vmem:[#allocation5 + $0x68] sm:$0xff]
    %v698 = vld [vmem:[#allocation5 + $0x70] sm:$0xff]
    %v699 = vld [vmem:[#allocation5 + $0x78] sm:$0xff]
    %700 = vmatprep.subr.mxu0 0.0
    %701 = vmatpush1.msra.mxu0 %v684
    %702 = vmatprep.subr.mxu0 0.0
    %703 = vmatpush1.msra.mxu0 %v685
    %704 = vmatprep.subr.mxu0 0.0
    %705 = vmatpush1.msra.mxu0 %v686
    %706 = vmatprep.subr.mxu0 0.0
    %707 = vmatpush1.msra.mxu0 %v687
    %708 = vmatprep.subr.mxu0 0.0
    %709 = vmatpush1.msra.mxu0 %v688
    %710 = vmatprep.subr.mxu0 0.0
    %711 = vmatpush1.msra.mxu0 %v689
    %712 = vmatprep.subr.mxu0 0.0
    %713 = vmatpush1.msra.mxu0 %v690
    %714 = vmatprep.subr.mxu0 0.0
    %715 = vmatpush1.msra.mxu0 %v691
    %716 = vmatprep.subr.mxu0 0.0
    %717 = vmatpush1.msra.mxu0 %v692
    %718 = vmatprep.subr.mxu0 0.0
    %719 = vmatpush1.msra.mxu0 %v693
    %720 = vmatprep.subr.mxu0 0.0
    %721 = vmatpush1.msra.mxu0 %v694
    %722 = vmatprep.subr.mxu0 0.0
    %723 = vmatpush1.msra.mxu0 %v695
    %724 = vmatprep.subr.mxu0 0.0
    %725 = vmatpush1.msra.mxu0 %v696
    %726 = vmatprep.subr.mxu0 0.0
    %727 = vmatpush1.msra.mxu0 %v697
    %728 = vmatprep.subr.mxu0 0.0
    %729 = vmatpush1.msra.mxu0 %v698
    %730 = vmatprep.subr.mxu0 0.0
    %731 = vmatpush1.msra.mxu0 %v699
    %732 = vmatprep.subr.mxu0 0.0
    %733 = vmatpush1.msra.mxu0 0.0
    %734 = vmatprep.subr.mxu0 0.0
    %735 = vmatpush1.msra.mxu0 0.0
    %736 = vmatprep.subr.mxu0 0.0
    %737 = vmatpush1.msra.mxu0 0.0
    %738 = vmatprep.subr.mxu0 0.0
    %739 = vmatpush1.msra.mxu0 0.0
    %740 = vmatprep.subr.mxu0 0.0
    %741 = vmatpush1.msra.mxu0 0.0
    %742 = vmatprep.subr.mxu0 0.0
    %743 = vmatpush1.msra.mxu0 0.0
    %744 = vmatprep.subr.mxu0 0.0
    %745 = vmatpush1.msra.mxu0 0.0
    %746 = vmatprep.subr.mxu0 0.0
    %747 = vmatpush1.msra.mxu0 0.0
    %748 = vmatprep.subr.mxu0 0.0
    %749 = vmatpush1.msra.mxu0 0.0
    %750 = vmatprep.subr.mxu0 0.0
    %751 = vmatpush1.msra.mxu0 0.0
    %752 = vmatprep.subr.mxu0 0.0
    %753 = vmatpush1.msra.mxu0 0.0
    %754 = vmatprep.subr.mxu0 0.0
    %755 = vmatpush1.msra.mxu0 0.0
    %756 = vmatprep.subr.mxu0 0.0
    %757 = vmatpush1.msra.mxu0 0.0
    %758 = vmatprep.subr.mxu0 0.0
    %759 = vmatpush1.msra.mxu0 0.0
    %760 = vmatprep.subr.mxu0 0.0
    %761 = vmatpush1.msra.mxu0 0.0
    %762 = vmatprep.subr.mxu0 0.0
    %763 = vmatpush1.msra.mxu0 0.0
    %764 = vmatprep.mubr.f32.mxu0 0.0
    %765 = vmatmul.mubr.f32.gmra.mrb[0].mxu0 %v676
    %v766 = vpop.f32.mrb[0].mxu0
    %v767 = vadd.f32 0.0, %v766
    %v768 = vpop.f32.mrb[0].mxu0
    %769 = vmatprep.mubr.f32.mxu0 0.0
    %770 = vmatmul.mubr.f32.gmra.mrb[0].mxu0 %v677
    %v771 = vpop.f32.mrb[0].mxu0
    %v772 = vadd.f32 0.0, %v771
    %v773 = vpop.f32.mrb[0].mxu0
    %774 = vmatprep.mubr.f32.mxu0 0.0
    %775 = vmatmul.mubr.f32.gmra.mrb[0].mxu0 %v678
    %v776 = vpop.f32.mrb[0].mxu0
    %v777 = vadd.f32 0.0, %v776
    %v778 = vpop.f32.mrb[0].mxu0
    %779 = vmatprep.mubr.f32.mxu0 0.0
    %780 = vmatmul.mubr.f32.gmra.mrb[0].mxu0 %v679
    %v781 = vpop.f32.mrb[0].mxu0
    %v782 = vadd.f32 0.0, %v781
    %v783 = vpop.f32.mrb[0].mxu0
    %784 = vmatprep.mubr.f32.mxu0 0.0
    %785 = vmatmul.mubr.f32.gmra.mrb[0].mxu0 %v680
    %v786 = vpop.f32.mrb[0].mxu0
    %v787 = vadd.f32 0.0, %v786
    %v788 = vpop.f32.mrb[0].mxu0
    %789 = vmatprep.mubr.f32.mxu0 0.0
    %790 = vmatmul.mubr.f32.gmra.mrb[0].mxu0 %v681
    %v791 = vpop.f32.mrb[0].mxu0
    %v792 = vadd.f32 0.0, %v791
    %v793 = vpop.f32.mrb[0].mxu0
    %794 = vmatprep.mubr.f32.mxu0 0.0
    %795 = vmatmul.mubr.f32.gmra.mrb[0].mxu0 %v682
    %v796 = vpop.f32.mrb[0].mxu0
    %v797 = vadd.f32 0.0, %v796
    %v798 = vpop.f32.mrb[0].mxu0
    %799 = vmatprep.mubr.f32.mxu0 0.0
    %800 = vmatmul.mubr.f32.gmra.mrb[0].mxu0 %v683
    %v801 = vpop.f32.mrb[0].mxu0
    %v802 = vadd.f32 0.0, %v801
    %v803 = vpop.f32.mrb[0].mxu0
    %804 = vdwg.mxu0
    %v805 = vadd.f32 %v767, %v772
    %v806 = vadd.f32 %v805, %v777
    %v807 = vadd.f32 %v806, %v782
    %v808 = vadd.f32 %v807, %v787
    %v809 = vadd.f32 %v808, %v792
    %v810 = vadd.f32 %v809, %v797
    %v811 = vadd.f32 %v810, %v802
    %v812 = vrot.slane %v811, 4
    %v813 = vadd.f32 %v811, %v812
    %v814 = vrot.slane %v813, 2
    %v815 = vadd.f32 %v813, %v814
    %v816 = vrot.slane %v815, 1
    %v817 = vadd.f32 %v815, %v816
    %v818 = vmul.f32 %v817, %v444
    %v819 = vmul.f32 %v767, %v767
    %v820 = vmul.f32 %v772, %v772
    %v821 = vmul.f32 %v777, %v777
    %v822 = vmul.f32 %v782, %v782
    %v823 = vmul.f32 %v787, %v787
    %v824 = vmul.f32 %v792, %v792
    %v825 = vmul.f32 %v797, %v797
    %v826 = vmul.f32 %v802, %v802
    %v827 = vadd.f32 %v819, %v820
    %v828 = vadd.f32 %v827, %v821
    %v829 = vadd.f32 %v828, %v822
    %v830 = vadd.f32 %v829, %v823
    %v831 = vadd.f32 %v830, %v824
    %v832 = vadd.f32 %v831, %v825
    %v833 = vadd.f32 %v832, %v826
    %v834 = vrot.slane %v833, 4
    %v835 = vadd.f32 %v833, %v834
    %v836 = vrot.slane %v835, 2
    %v837 = vadd.f32 %v835, %v836
    %v838 = vrot.slane %v837, 1
    %v839 = vadd.f32 %v837, %v838
    %v840 = vmul.f32 %v839, %v444
    %v841 = vmul.f32 %v818, %v818
    %v842 = vsub.f32 %v840, %v841
    %v843 = vmax.f32 %v842, 0.0
    %v844 = vsub.f32 %v767, %v818
    %v845 = vsub.f32 %v772, %v818
    %v846 = vsub.f32 %v777, %v818
    %v847 = vsub.f32 %v782, %v818
    %v848 = vsub.f32 %v787, %v818
    %v849 = vsub.f32 %v792, %v818
    %v850 = vsub.f32 %v797, %v818
    %v851 = vsub.f32 %v802, %v818
    %v852 = vadd.f32 %v843, 1e-05
    %v853 = vrsqrt.pop %v852
    %v854 = vmul.f32 %v853, %v89
    %v855 = vlaneseq
    %v856 = vshrl.u32 %v855, 7
    %v857 = vsub.s32 2, %v856
    %v858 = vrot.slane %v854, %v857
    %v859 = vmul.f32 %v844, %v858
    %v860 = vmul.f32 %v845, %v858
    %v861 = vmul.f32 %v846, %v858
    %v862 = vmul.f32 %v847, %v858
    %v863 = vmul.f32 %v848, %v858
    %v864 = vmul.f32 %v849, %v858
    %v865 = vmul.f32 %v850, %v858
    %v866 = vmul.f32 %v851, %v858
    %v867 = vlaneseq
    %v868 = vshrl.u32 %v867, 7
    %v869 = vsub.s32 3, %v868
    %v870 = vrot.slane %v89, %v869
    %v871 = vadd.f32 %v859, %v870
    %v872 = vadd.f32 %v860, %v870
    %v873 = vadd.f32 %v861, %v870
    %v874 = vadd.f32 %v862, %v870
    %v875 = vadd.f32 %v863, %v870
    %v876 = vadd.f32 %v864, %v870
    %v877 = vadd.f32 %v865, %v870
    %v878 = vadd.f32 %v866, %v870
    %v879 = vmax.f32 %v871, 0.0
    %v880 = vmax.f32 %v872, 0.0
    %v881 = vmax.f32 %v873, 0.0
    %v882 = vmax.f32 %v874, 0.0
    %v883 = vmax.f32 %v875, 0.0
    %v884 = vmax.f32 %v876, 0.0
    %v885 = vmax.f32 %v877, 0.0
    %v886 = vmax.f32 %v878, 0.0
    %887 = vmatprep.subr.mxu0 0.0
    %888 = vmatpush1.msra.mxu0 %v879
    %889 = vmatprep.subr.mxu0 0.0
    %890 = vmatpush1.msra.mxu0 %v880
    %891 = vmatprep.subr.mxu0 0.0
    %892 = vmatpush1.msra.mxu0 %v881
    %893 = vmatprep.subr.mxu0 0.0
    %894 = vmatpush1.msra.mxu0 %v882
    %895 = vmatprep.subr.mxu0 0.0
    %896 = vmatpush1.msra.mxu0 %v883
    %897 = vmatprep.subr.mxu0 0.0
    %898 = vmatpush1.msra.mxu0 %v884
    %899 = vmatprep.subr.mxu0 0.0
    %900 = vmatpush1.msra.mxu0 %v885
    %901 = vmatprep.subr.mxu0 0.0
    %902 = vmatpush1.msra.mxu0 %v886
    %903 = vmatprep.subr.mxu0 0.0
    %904 = vmatpush1.msra.mxu0 0.0
    %905 = vmatprep.subr.mxu0 0.0
    %906 = vmatpush1.msra.mxu0 0.0
    %907 = vmatprep.subr.mxu0 0.0
    %908 = vmatpush1.msra.mxu0 0.0
    %909 = vmatprep.subr.mxu0 0.0
    %910 = vmatpush1.msra.mxu0 0.0
    %911 = vmatprep.subr.mxu0 0.0
    %912 = vmatpush1.msra.mxu0 0.0
    %913 = vmatprep.subr.mxu0 0.0
    %914 = vmatpush1.msra.mxu0 0.0
    %915 = vmatprep.subr.mxu0 0.0
    %916 = vmatpush1.msra.mxu0 0.0
    %917 = vmatprep.subr.mxu0 0.0
    %918 = vmatpush1.msra.mxu0 0.0
    %919 = vmatprep.subr.mxu0 0.0
    %920 = vmatpush1.msra.mxu0 0.0
    %921 = vmatprep.subr.mxu0 0.0
    %922 = vmatpush1.msra.mxu0 0.0
    %923 = vmatprep.subr.mxu0 0.0
    %924 = vmatpush1.msra.mxu0 0.0
    %925 = vmatprep.subr.mxu0 0.0
    %926 = vmatpush1.msra.mxu0 0.0
    %927 = vmatprep.subr.mxu0 0.0
    %928 = vmatpush1.msra.mxu0 0.0
    %929 = vmatprep.subr.mxu0 0.0
    %930 = vmatpush1.msra.mxu0 0.0
    %931 = vmatprep.subr.mxu0 0.0
    %932 = vmatpush1.msra.mxu0 0.0
    %933 = vmatprep.subr.mxu0 0.0
    %934 = vmatpush1.msra.mxu0 0.0
    %935 = vmatprep.subr.mxu0 0.0
    %936 = vmatpush1.msra.mxu0 0.0
    %937 = vmatprep.subr.mxu0 0.0
    %938 = vmatpush1.msra.mxu0 0.0
    %939 = vmatprep.subr.mxu0 0.0
    %940 = vmatpush1.msra.mxu0 0.0
    %941 = vmatprep.subr.mxu0 0.0
    %942 = vmatpush1.msra.mxu0 0.0
    %943 = vmatprep.subr.mxu0 0.0
    %944 = vmatpush1.msra.mxu0 0.0
    %945 = vmatprep.subr.mxu0 0.0
    %946 = vmatpush1.msra.mxu0 0.0
    %947 = vmatprep.subr.mxu0 0.0
    %948 = vmatpush1.msra.mxu0 0.0
    %949 = vmatprep.subr.mxu0 0.0
    %950 = vmatpush1.msra.mxu0 0.0
    %951 = vmatprep.mubr.f32.mxu0 0.0
    %952 = vmatmul.mubr.f32.gmra.mrb[0].mxu0 %v101
    %v953 = vpop.f32.mrb[0].mxu0
    %v954 = vadd.f32 0.0, %v953
    %v955 = vpop.f32.mrb[0].mxu0
    %956 = vmatprep.mubr.f32.mxu0 0.0
    %957 = vmatmul.mubr.f32.gmra.mrb[0].mxu0 %v104
    %v958 = vpop.f32.mrb[0].mxu0
    %v959 = vadd.f32 0.0, %v958
    %v960 = vpop.f32.mrb[0].mxu0
    %961 = vmatprep.mubr.f32.mxu0 0.0
    %962 = vmatmul.mubr.f32.gmra.mrb[0].mxu0 %v107
    %v963 = vpop.f32.mrb[0].mxu0
    %v964 = vadd.f32 0.0, %v963
    %v965 = vpop.f32.mrb[0].mxu0
    %966 = vmatprep.mubr.f32.mxu0 0.0
    %967 = vmatmul.mubr.f32.gmra.mrb[0].mxu0 %v110
    %v968 = vpop.f32.mrb[0].mxu0
    %v969 = vadd.f32 0.0, %v968
    %v970 = vpop.f32.mrb[0].mxu0
    %971 = vmatprep.mubr.f32.mxu0 0.0
    %972 = vmatmul.mubr.f32.gmra.mrb[0].mxu0 %v113
    %v973 = vpop.f32.mrb[0].mxu0
    %v974 = vadd.f32 0.0, %v973
    %v975 = vpop.f32.mrb[0].mxu0
    %976 = vmatprep.mubr.f32.mxu0 0.0
    %977 = vmatmul.mubr.f32.gmra.mrb[0].mxu0 %v116
    %v978 = vpop.f32.mrb[0].mxu0
    %v979 = vadd.f32 0.0, %v978
    %v980 = vpop.f32.mrb[0].mxu0
    %981 = vmatprep.mubr.f32.mxu0 0.0
    %982 = vmatmul.mubr.f32.gmra.mrb[0].mxu0 %v119
    %v983 = vpop.f32.mrb[0].mxu0
    %v984 = vadd.f32 0.0, %v983
    %v985 = vpop.f32.mrb[0].mxu0
    %986 = vmatprep.mubr.f32.mxu0 0.0
    %987 = vmatmul.mubr.f32.gmra.mrb[0].mxu0 %v122
    %v988 = vpop.f32.mrb[0].mxu0
    %v989 = vadd.f32 0.0, %v988
    %v990 = vpop.f32.mrb[0].mxu0
    %991 = vdwg.mxu0
    %992 = vst [vmem:[#allocation2] sm:$0xff] %v879
    %993 = vst [vmem:[#allocation2 + $0x10] sm:$0xff] %v880
    %994 = vst [vmem:[#allocation2 + $0x20] sm:$0xff] %v881
    %995 = vst [vmem:[#allocation2 + $0x30] sm:$0xff] %v882
    %996 = vst [vmem:[#allocation2 + $0x40] sm:$0xff] %v883
    %997 = vst [vmem:[#allocation2 + $0x50] sm:$0xff] %v884
    %998 = vst [vmem:[#allocation2 + $0x60] sm:$0xff] %v885
    %999 = vst [vmem:[#allocation2 + $0x70] sm:$0xff] %v886
    %1000 = vst [vmem:[#allocation2 + $0x8] sm:$0xff] %v954
    %1001 = vst [vmem:[#allocation2 + $0x18] sm:$0xff] %v959
    %1002 = vst [vmem:[#allocation2 + $0x28] sm:$0xff] %v964
    %1003 = vst [vmem:[#allocation2 + $0x38] sm:$0xff] %v969
    %1004 = vst [vmem:[#allocation2 + $0x48] sm:$0xff] %v974
    %1005 = vst [vmem:[#allocation2 + $0x58] sm:$0xff] %v979
    %1006 = vst [vmem:[#allocation2 + $0x68] sm:$0xff] %v984
    %1007 = vst [vmem:[#allocation2 + $0x78] sm:$0xff] %v989
    %v1008 = vld [vmem:[#allocation2] sm:$0xff]
    %v1009 = vld [vmem:[#allocation2 + $0x8] sm:$0xff]
    %v1010 = vld [vmem:[#allocation2 + $0x10] sm:$0xff]
    %v1011 = vld [vmem:[#allocation2 + $0x18] sm:$0xff]
    %v1012 = vld [vmem:[#allocation2 + $0x20] sm:$0xff]
    %v1013 = vld [vmem:[#allocation2 + $0x28] sm:$0xff]
    %v1014 = vld [vmem:[#allocation2 + $0x30] sm:$0xff]
    %v1015 = vld [vmem:[#allocation2 + $0x38] sm:$0xff]
    %v1016 = vld [vmem:[#allocation2 + $0x40] sm:$0xff]
    %v1017 = vld [vmem:[#allocation2 + $0x48] sm:$0xff]
    %v1018 = vld [vmem:[#allocation2 + $0x50] sm:$0xff]
    %v1019 = vld [vmem:[#allocation2 + $0x58] sm:$0xff]
    %v1020 = vld [vmem:[#allocation2 + $0x60] sm:$0xff]
    %v1021 = vld [vmem:[#allocation2 + $0x68] sm:$0xff]
    %v1022 = vld [vmem:[#allocation2 + $0x70] sm:$0xff]
    %v1023 = vld [vmem:[#allocation2 + $0x78] sm:$0xff]
    %v1024 = vld [vmem:[#allocation7] sm:$0xff]
    %v1025 = vld [vmem:[#allocation7 + $0x8] sm:$0xff]
    %v1026 = vld [vmem:[#allocation7 + $0x10] sm:$0xff]
    %v1027 = vld [vmem:[#allocation7 + $0x18] sm:$0xff]
    %v1028 = vld [vmem:[#allocation7 + $0x20] sm:$0xff]
    %v1029 = vld [vmem:[#allocation7 + $0x28] sm:$0xff]
    %v1030 = vld [vmem:[#allocation7 + $0x30] sm:$0xff]
    %v1031 = vld [vmem:[#allocation7 + $0x38] sm:$0xff]
    %v1032 = vld [vmem:[#allocation7 + $0x40] sm:$0xff]
    %v1033 = vld [vmem:[#allocation7 + $0x48] sm:$0xff]
    %v1034 = vld [vmem:[#allocation7 + $0x50] sm:$0xff]
    %v1035 = vld [vmem:[#allocation7 + $0x58] sm:$0xff]
    %v1036 = vld [vmem:[#allocation7 + $0x60] sm:$0xff]
    %v1037 = vld [vmem:[#allocation7 + $0x68] sm:$0xff]
    %v1038 = vld [vmem:[#allocation7 + $0x70] sm:$0xff]
    %v1039 = vld [vmem:[#allocation7 + $0x78] sm:$0xff]
    %v1040 = vld [vmem:[#allocation7 + $0x80] sm:$0xff]
    %v1041 = vld [vmem:[#allocation7 + $0x88] sm:$0xff]
    %v1042 = vld [vmem:[#allocation7 + $0x90] sm:$0xff]
    %v1043 = vld [vmem:[#allocation7 + $0x98] sm:$0xff]
    %v1044 = vld [vmem:[#allocation7 + $0xa0] sm:$0xff]
    %v1045 = vld [vmem:[#allocation7 + $0xa8] sm:$0xff]
    %v1046 = vld [vmem:[#allocation7 + $0xb0] sm:$0xff]
    %v1047 = vld [vmem:[#allocation7 + $0xb8] sm:$0xff]
    %v1048 = vld [vmem:[#allocation7 + $0xc0] sm:$0xff]
    %v1049 = vld [vmem:[#allocation7 + $0xc8] sm:$0xff]
    %v1050 = vld [vmem:[#allocation7 + $0xd0] sm:$0xff]
    %v1051 = vld [vmem:[#allocation7 + $0xd8] sm:$0xff]
    %v1052 = vld [vmem:[#allocation7 + $0xe0] sm:$0xff]
    %v1053 = vld [vmem:[#allocation7 + $0xe8] sm:$0xff]
    %v1054 = vld [vmem:[#allocation7 + $0xf0] sm:$0xff]
    %v1055 = vld [vmem:[#allocation7 + $0xf8] sm:$0xff]
    %v1056 = vld [vmem:[#allocation7 + $0x100] sm:$0xff]
    %v1057 = vld [vmem:[#allocation7 + $0x108] sm:$0xff]
    %v1058 = vld [vmem:[#allocation7 + $0x110] sm:$0xff]
    %v1059 = vld [vmem:[#allocation7 + $0x118] sm:$0xff]
    %v1060 = vld [vmem:[#allocation7 + $0x120] sm:$0xff]
    %v1061 = vld [vmem:[#allocation7 + $0x128] sm:$0xff]
    %v1062 = vld [vmem:[#allocation7 + $0x130] sm:$0xff]
    %v1063 = vld [vmem:[#allocation7 + $0x138] sm:$0xff]
    %v1064 = vld [vmem:[#allocation7 + $0x140] sm:$0xff]
    %v1065 = vld [vmem:[#allocation7 + $0x148] sm:$0xff]
    %v1066 = vld [vmem:[#allocation7 + $0x150] sm:$0xff]
    %v1067 = vld [vmem:[#allocation7 + $0x158] sm:$0xff]
    %v1068 = vld [vmem:[#allocation7 + $0x160] sm:$0xff]
    %v1069 = vld [vmem:[#allocation7 + $0x168] sm:$0xff]
    %v1070 = vld [vmem:[#allocation7 + $0x170] sm:$0xff]
    %v1071 = vld [vmem:[#allocation7 + $0x178] sm:$0xff]
    %v1072 = vld [vmem:[#allocation7 + $0x180] sm:$0xff]
    %v1073 = vld [vmem:[#allocation7 + $0x188] sm:$0xff]
    %v1074 = vld [vmem:[#allocation7 + $0x190] sm:$0xff]
    %v1075 = vld [vmem:[#allocation7 + $0x198] sm:$0xff]
    %v1076 = vld [vmem:[#allocation7 + $0x1a0] sm:$0xff]
    %v1077 = vld [vmem:[#allocation7 + $0x1a8] sm:$0xff]
    %v1078 = vld [vmem:[#allocation7 + $0x1b0] sm:$0xff]
    %v1079 = vld [vmem:[#allocation7 + $0x1b8] sm:$0xff]
    %v1080 = vld [vmem:[#allocation7 + $0x1c0] sm:$0xff]
    %v1081 = vld [vmem:[#allocation7 + $0x1c8] sm:$0xff]
    %v1082 = vld [vmem:[#allocation7 + $0x1d0] sm:$0xff]
    %v1083 = vld [vmem:[#allocation7 + $0x1d8] sm:$0xff]
    %v1084 = vld [vmem:[#allocation7 + $0x1e0] sm:$0xff]
    %v1085 = vld [vmem:[#allocation7 + $0x1e8] sm:$0xff]
    %v1086 = vld [vmem:[#allocation7 + $0x1f0] sm:$0xff]
    %v1087 = vld [vmem:[#allocation7 + $0x1f8] sm:$0xff]
    %1088 = vmatprep.subr.mxu0 %v1025
    %1089 = vmatpush1.msra.mxu0 %v1024
    %1090 = vmatprep.subr.mxu0 %v1027
    %1091 = vmatpush1.msra.mxu0 %v1026
    %1092 = vmatprep.subr.mxu0 %v1029
    %1093 = vmatpush1.msra.mxu0 %v1028
    %1094 = vmatprep.subr.mxu0 %v1031
    %1095 = vmatpush1.msra.mxu0 %v1030
    %1096 = vmatprep.subr.mxu0 %v1033
    %1097 = vmatpush1.msra.mxu0 %v1032
    %1098 = vmatprep.subr.mxu0 %v1035
    %1099 = vmatpush1.msra.mxu0 %v1034
    %1100 = vmatprep.subr.mxu0 %v1037
    %1101 = vmatpush1.msra.mxu0 %v1036
    %1102 = vmatprep.subr.mxu0 %v1039
    %1103 = vmatpush1.msra.mxu0 %v1038
    %1104 = vmatprep.subr.mxu0 %v1041
    %1105 = vmatpush1.msra.mxu0 %v1040
    %1106 = vmatprep.subr.mxu0 %v1043
    %1107 = vmatpush1.msra.mxu0 %v1042
    %1108 = vmatprep.subr.mxu0 %v1045
    %1109 = vmatpush1.msra.mxu0 %v1044
    %1110 = vmatprep.subr.mxu0 %v1047
    %1111 = vmatpush1.msra.mxu0 %v1046
    %1112 = vmatprep.subr.mxu0 %v1049
    %1113 = vmatpush1.msra.mxu0 %v1048
    %1114 = vmatprep.subr.mxu0 %v1051
    %1115 = vmatpush1.msra.mxu0 %v1050
    %1116 = vmatprep.subr.mxu0 %v1053
    %1117 = vmatpush1.msra.mxu0 %v1052
    %1118 = vmatprep.subr.mxu0 %v1055
    %1119 = vmatpush1.msra.mxu0 %v1054
    %1120 = vmatprep.subr.mxu0 %v1057
    %1121 = vmatpush1.msra.mxu0 %v1056
    %1122 = vmatprep.subr.mxu0 %v1059
    %1123 = vmatpush1.msra.mxu0 %v1058
    %1124 = vmatprep.subr.mxu0 %v1061
    %1125 = vmatpush1.msra.mxu0 %v1060
    %1126 = vmatprep.subr.mxu0 %v1063
    %1127 = vmatpush1.msra.mxu0 %v1062
    %1128 = vmatprep.subr.mxu0 %v1065
    %1129 = vmatpush1.msra.mxu0 %v1064
    %1130 = vmatprep.subr.mxu0 %v1067
    %1131 = vmatpush1.msra.mxu0 %v1066
    %1132 = vmatprep.subr.mxu0 %v1069
    %1133 = vmatpush1.msra.mxu0 %v1068
    %1134 = vmatprep.subr.mxu0 %v1071
    %1135 = vmatpush1.msra.mxu0 %v1070
    %1136 = vmatprep.subr.mxu0 %v1073
    %1137 = vmatpush1.msra.mxu0 %v1072
    %1138 = vmatprep.subr.mxu0 %v1075
    %1139 = vmatpush1.msra.mxu0 %v1074
    %1140 = vmatprep.subr.mxu0 %v1077
    %1141 = vmatpush1.msra.mxu0 %v1076
    %1142 = vmatprep.subr.mxu0 %v1079
    %1143 = vmatpush1.msra.mxu0 %v1078
    %1144 = vmatprep.subr.mxu0 %v1081
    %1145 = vmatpush1.msra.mxu0 %v1080
    %1146 = vmatprep.subr.mxu0 %v1083
    %1147 = vmatpush1.msra.mxu0 %v1082
    %1148 = vmatprep.subr.mxu0 %v1085
    %1149 = vmatpush1.msra.mxu0 %v1084
    %1150 = vmatprep.subr.mxu0 %v1087
    %1151 = vmatpush1.msra.mxu0 %v1086
    %1152 = vmatprep.mubr.f32.mxu0 %v1009
    %1153 = vmatmul.mubr.f32.gmra.mrb[0].mxu0 %v1008
    %v1154 = vpop.f32.mrb[0].mxu0
    %v1155 = vadd.f32 0.0, %v1154
    %v1156 = vpop.f32.mrb[0].mxu0
    %v1157 = vadd.f32 0.0, %v1156
    %1158 = vmatprep.mubr.f32.mxu0 %v1011
    %1159 = vmatmul.mubr.f32.gmra.mrb[0].mxu0 %v1010
    %v1160 = vpop.f32.mrb[0].mxu0
    %v1161 = vadd.f32 0.0, %v1160
    %v1162 = vpop.f32.mrb[0].mxu0
    %v1163 = vadd.f32 0.0, %v1162
    %1164 = vmatprep.mubr.f32.mxu0 %v1013
    %1165 = vmatmul.mubr.f32.gmra.mrb[0].mxu0 %v1012
    %v1166 = vpop.f32.mrb[0].mxu0
    %v1167 = vadd.f32 0.0, %v1166
    %v1168 = vpop.f32.mrb[0].mxu0
    %v1169 = vadd.f32 0.0, %v1168
    %1170 = vmatprep.mubr.f32.mxu0 %v1015
    %1171 = vmatmul.mubr.f32.gmra.mrb[0].mxu0 %v1014
    %v1172 = vpop.f32.mrb[0].mxu0
    %v1173 = vadd.f32 0.0, %v1172
    %v1174 = vpop.f32.mrb[0].mxu0
    %v1175 = vadd.f32 0.0, %v1174
    %1176 = vmatprep.mubr.f32.mxu0 %v1017
    %1177 = vmatmul.mubr.f32.gmra.mrb[0].mxu0 %v1016
    %v1178 = vpop.f32.mrb[0].mxu0
    %v1179 = vadd.f32 0.0, %v1178
    %v1180 = vpop.f32.mrb[0].mxu0
    %v1181 = vadd.f32 0.0, %v1180
    %1182 = vmatprep.mubr.f32.mxu0 %v1019
    %1183 = vmatmul.mubr.f32.gmra.mrb[0].mxu0 %v1018
    %v1184 = vpop.f32.mrb[0].mxu0
    %v1185 = vadd.f32 0.0, %v1184
    %v1186 = vpop.f32.mrb[0].mxu0
    %v1187 = vadd.f32 0.0, %v1186
    %1188 = vmatprep.mubr.f32.mxu0 %v1021
    %1189 = vmatmul.mubr.f32.gmra.mrb[0].mxu0 %v1020
    %v1190 = vpop.f32.mrb[0].mxu0
    %v1191 = vadd.f32 0.0, %v1190
    %v1192 = vpop.f32.mrb[0].mxu0
    %v1193 = vadd.f32 0.0, %v1192
    %1194 = vmatprep.mubr.f32.mxu0 %v1023
    %1195 = vmatmul.mubr.f32.gmra.mrb[0].mxu0 %v1022
    %v1196 = vpop.f32.mrb[0].mxu0
    %v1197 = vadd.f32 0.0, %v1196
    %v1198 = vpop.f32.mrb[0].mxu0
    %v1199 = vadd.f32 0.0, %v1198
    %1200 = vdwg.mxu0
    %v1201 = vadd.f32 %v1155, %v1161
    %v1202 = vadd.f32 %v1201, %v1167
    %v1203 = vadd.f32 %v1202, %v1173
    %v1204 = vadd.f32 %v1203, %v1179
    %v1205 = vadd.f32 %v1204, %v1185
    %v1206 = vadd.f32 %v1205, %v1191
    %v1207 = vadd.f32 %v1206, %v1197
    %v1208 = vrot.slane %v1207, 4
    %v1209 = vadd.f32 %v1207, %v1208
    %v1210 = vrot.slane %v1209, 2
    %v1211 = vadd.f32 %v1209, %v1210
    %v1212 = vrot.slane %v1211, 1
    %v1213 = vadd.f32 %v1211, %v1212
    %v1214 = vadd.f32 %v1157, %v1163
    %v1215 = vadd.f32 %v1214, %v1169
    %v1216 = vadd.f32 %v1215, %v1175
    %v1217 = vadd.f32 %v1216, %v1181
    %v1218 = vadd.f32 %v1217, %v1187
    %v1219 = vadd.f32 %v1218, %v1193
    %v1220 = vadd.f32 %v1219, %v1199
    %v1221 = vrot.slane %v1220, 4
    %v1222 = vadd.f32 %v1220, %v1221
    %v1223 = vrot.slane %v1222, 2
    %v1224 = vadd.f32 %v1222, %v1223
    %v1225 = vrot.slane %v1224, 1
    %v1226 = vadd.f32 %v1224, %v1225
    %v1227 = vmul.f32 %v1213, %v444
    %v1228 = vmul.f32 %v1226, %v444
    %v1229 = vmul.f32 %v1155, %v1155
    %v1230 = vmul.f32 %v1157, %v1157
    %v1231 = vmul.f32 %v1161, %v1161
    %v1232 = vmul.f32 %v1163, %v1163
    %v1233 = vmul.f32 %v1167, %v1167
    %v1234 = vmul.f32 %v1169, %v1169
    %v1235 = vmul.f32 %v1173, %v1173
    %v1236 = vmul.f32 %v1175, %v1175
    %v1237 = vmul.f32 %v1179, %v1179
    %v1238 = vmul.f32 %v1181, %v1181
    %v1239 = vmul.f32 %v1185, %v1185
    %v1240 = vmul.f32 %v1187, %v1187
    %v1241 = vmul.f32 %v1191, %v1191
    %v1242 = vmul.f32 %v1193, %v1193
    %v1243 = vmul.f32 %v1197, %v1197
    %v1244 = vmul.f32 %v1199, %v1199
    %v1245 = vadd.f32 %v1229, %v1231
    %v1246 = vadd.f32 %v1245, %v1233
    %v1247 = vadd.f32 %v1246, %v1235
    %v1248 = vadd.f32 %v1247, %v1237
    %v1249 = vadd.f32 %v1248, %v1239
    %v1250 = vadd.f32 %v1249, %v1241
    %v1251 = vadd.f32 %v1250, %v1243
    %v1252 = vrot.slane %v1251, 4
    %v1253 = vadd.f32 %v1251, %v1252
    %v1254 = vrot.slane %v1253, 2
    %v1255 = vadd.f32 %v1253, %v1254
    %v1256 = vrot.slane %v1255, 1
    %v1257 = vadd.f32 %v1255, %v1256
    %v1258 = vadd.f32 %v1230, %v1232
    %v1259 = vadd.f32 %v1258, %v1234
    %v1260 = vadd.f32 %v1259, %v1236
    %v1261 = vadd.f32 %v1260, %v1238
    %v1262 = vadd.f32 %v1261, %v1240
    %v1263 = vadd.f32 %v1262, %v1242
    %v1264 = vadd.f32 %v1263, %v1244
    %v1265 = vrot.slane %v1264, 4
    %v1266 = vadd.f32 %v1264, %v1265
    %v1267 = vrot.slane %v1266, 2
    %v1268 = vadd.f32 %v1266, %v1267
    %v1269 = vrot.slane %v1268, 1
    %v1270 = vadd.f32 %v1268, %v1269
    %v1271 = vmul.f32 %v1257, %v444
    %v1272 = vmul.f32 %v1270, %v444
    %v1273 = vmul.f32 %v1227, %v1227
    %v1274 = vmul.f32 %v1228, %v1228
    %v1275 = vsub.f32 %v1271, %v1273
    %v1276 = vsub.f32 %v1272, %v1274
    %v1277 = vmax.f32 %v1275, 0.0
    %v1278 = vmax.f32 %v1276, 0.0
    %v1279 = vsub.f32 %v1155, %v1227
    %v1280 = vsub.f32 %v1157, %v1228
    %v1281 = vsub.f32 %v1161, %v1227
    %v1282 = vsub.f32 %v1163, %v1228
    %v1283 = vsub.f32 %v1167, %v1227
    %v1284 = vsub.f32 %v1169, %v1228
    %v1285 = vsub.f32 %v1173, %v1227
    %v1286 = vsub.f32 %v1175, %v1228
    %v1287 = vsub.f32 %v1179, %v1227
    %v1288 = vsub.f32 %v1181, %v1228
    %v1289 = vsub.f32 %v1185, %v1227
    %v1290 = vsub.f32 %v1187, %v1228
    %v1291 = vsub.f32 %v1191, %v1227
    %v1292 = vsub.f32 %v1193, %v1228
    %v1293 = vsub.f32 %v1197, %v1227
    %v1294 = vsub.f32 %v1199, %v1228
    %v1295 = vadd.f32 %v1277, 1e-05
    %v1296 = vadd.f32 %v1278, 1e-05
    %v1297 = vrsqrt.pop %v1295
    %v1298 = vrsqrt.pop %v1296
    %v1299 = vmul.f32 %v1297, %v89
    %v1300 = vmul.f32 %v1298, %v90
    %v1301 = vlaneseq
    %v1302 = vshrl.u32 %v1301, 7
    %v1303 = vsub.s32 4, %v1302
    %v1304 = vrot.slane %v1299, %v1303
    %v1305 = vlaneseq
    %v1306 = vshrl.u32 %v1305, 7
    %v1307 = vsub.s32 4, %v1306
    %v1308 = vrot.slane %v1300, %v1307
    %v1309 = vmul.f32 %v1279, %v1304
    %v1310 = vmul.f32 %v1280, %v1308
    %v1311 = vmul.f32 %v1281, %v1304
    %v1312 = vmul.f32 %v1282, %v1308
    %v1313 = vmul.f32 %v1283, %v1304
    %v1314 = vmul.f32 %v1284, %v1308
    %v1315 = vmul.f32 %v1285, %v1304
    %v1316 = vmul.f32 %v1286, %v1308
    %v1317 = vmul.f32 %v1287, %v1304
    %v1318 = vmul.f32 %v1288, %v1308
    %v1319 = vmul.f32 %v1289, %v1304
    %v1320 = vmul.f32 %v1290, %v1308
    %v1321 = vmul.f32 %v1291, %v1304
    %v1322 = vmul.f32 %v1292, %v1308
    %v1323 = vmul.f32 %v1293, %v1304
    %v1324 = vmul.f32 %v1294, %v1308
    %v1325 = vlaneseq
    %v1326 = vshrl.u32 %v1325, 7
    %v1327 = vsub.s32 5, %v1326
    %v1328 = vrot.slane %v89, %v1327
    %v1329 = vlaneseq
    %v1330 = vshrl.u32 %v1329, 7
    %v1331 = vsub.s32 5, %v1330
    %v1332 = vrot.slane %v90, %v1331
    %v1333 = vadd.f32 %v1309, %v1328
    %v1334 = vadd.f32 %v1310, %v1332
    %v1335 = vadd.f32 %v1311, %v1328
    %v1336 = vadd.f32 %v1312, %v1332
    %v1337 = vadd.f32 %v1313, %v1328
    %v1338 = vadd.f32 %v1314, %v1332
    %v1339 = vadd.f32 %v1315, %v1328
    %v1340 = vadd.f32 %v1316, %v1332
    %v1341 = vadd.f32 %v1317, %v1328
    %v1342 = vadd.f32 %v1318, %v1332
    %v1343 = vadd.f32 %v1319, %v1328
    %v1344 = vadd.f32 %v1320, %v1332
    %v1345 = vadd.f32 %v1321, %v1328
    %v1346 = vadd.f32 %v1322, %v1332
    %v1347 = vadd.f32 %v1323, %v1328
    %v1348 = vadd.f32 %v1324, %v1332
    %v1349 = vmax.f32 %v1333, 0.0
    %v1350 = vmax.f32 %v1334, 0.0
    %v1351 = vmax.f32 %v1335, 0.0
    %v1352 = vmax.f32 %v1336, 0.0
    %v1353 = vmax.f32 %v1337, 0.0
    %v1354 = vmax.f32 %v1338, 0.0
    %v1355 = vmax.f32 %v1339, 0.0
    %v1356 = vmax.f32 %v1340, 0.0
    %v1357 = vmax.f32 %v1341, 0.0
    %v1358 = vmax.f32 %v1342, 0.0
    %v1359 = vmax.f32 %v1343, 0.0
    %v1360 = vmax.f32 %v1344, 0.0
    %v1361 = vmax.f32 %v1345, 0.0
    %v1362 = vmax.f32 %v1346, 0.0
    %v1363 = vmax.f32 %v1347, 0.0
    %v1364 = vmax.f32 %v1348, 0.0
    %v1365 = vld [vmem:[#allocation8] sm:$0xff]
    %v1366 = vld [vmem:[#allocation8 + $0x8] sm:$0xff]
    %v1367 = vld [vmem:[#allocation8 + $0x10] sm:$0xff]
    %v1368 = vld [vmem:[#allocation8 + $0x18] sm:$0xff]
    %v1369 = vld [vmem:[#allocation8 + $0x20] sm:$0xff]
    %v1370 = vld [vmem:[#allocation8 + $0x28] sm:$0xff]
    %v1371 = vld [vmem:[#allocation8 + $0x30] sm:$0xff]
    %v1372 = vld [vmem:[#allocation8 + $0x38] sm:$0xff]
    %v1373 = vld [vmem:[#allocation8 + $0x40] sm:$0xff]
    %v1374 = vld [vmem:[#allocation8 + $0x48] sm:$0xff]
    %v1375 = vld [vmem:[#allocation8 + $0x50] sm:$0xff]
    %v1376 = vld [vmem:[#allocation8 + $0x58] sm:$0xff]
    %v1377 = vld [vmem:[#allocation8 + $0x60] sm:$0xff]
    %v1378 = vld [vmem:[#allocation8 + $0x68] sm:$0xff]
    %v1379 = vld [vmem:[#allocation8 + $0x70] sm:$0xff]
    %v1380 = vld [vmem:[#allocation8 + $0x78] sm:$0xff]
    %v1381 = vld [vmem:[#allocation8 + $0x80] sm:$0xff]
    %v1382 = vld [vmem:[#allocation8 + $0x88] sm:$0xff]
    %v1383 = vld [vmem:[#allocation8 + $0x90] sm:$0xff]
    %v1384 = vld [vmem:[#allocation8 + $0x98] sm:$0xff]
    %v1385 = vld [vmem:[#allocation8 + $0xa0] sm:$0xff]
    %v1386 = vld [vmem:[#allocation8 + $0xa8] sm:$0xff]
    %v1387 = vld [vmem:[#allocation8 + $0xb0] sm:$0xff]
    %v1388 = vld [vmem:[#allocation8 + $0xb8] sm:$0xff]
    %v1389 = vld [vmem:[#allocation8 + $0xc0] sm:$0xff]
    %v1390 = vld [vmem:[#allocation8 + $0xc8] sm:$0xff]
    %v1391 = vld [vmem:[#allocation8 + $0xd0] sm:$0xff]
    %v1392 = vld [vmem:[#allocation8 + $0xd8] sm:$0xff]
    %v1393 = vld [vmem:[#allocation8 + $0xe0] sm:$0xff]
    %v1394 = vld [vmem:[#allocation8 + $0xe8] sm:$0xff]
    %v1395 = vld [vmem:[#allocation8 + $0xf0] sm:$0xff]
    %v1396 = vld [vmem:[#allocation8 + $0xf8] sm:$0xff]
    %v1397 = vlaneseq
    %v1398 = vshrl.u32 %v1397, 7
    %v1399 = vsub.s32 6, %v1398
    %v1400 = vrot.slane %v89, %v1399
    %1401 = vmatprep.subr.mxu0 0.0
    %1402 = vmatpush1.msra.mxu0 %v1365
    %1403 = vmatprep.subr.mxu0 0.0
    %1404 = vmatpush1.msra.mxu0 %v1366
    %1405 = vmatprep.subr.mxu0 0.0
    %1406 = vmatpush1.msra.mxu0 %v1367
    %1407 = vmatprep.subr.mxu0 0.0
    %1408 = vmatpush1.msra.mxu0 %v1368
    %1409 = vmatprep.subr.mxu0 0.0
    %1410 = vmatpush1.msra.mxu0 %v1369
    %1411 = vmatprep.subr.mxu0 0.0
    %1412 = vmatpush1.msra.mxu0 %v1370
    %1413 = vmatprep.subr.mxu0 0.0
    %1414 = vmatpush1.msra.mxu0 %v1371
    %1415 = vmatprep.subr.mxu0 0.0
    %1416 = vmatpush1.msra.mxu0 %v1372
    %1417 = vmatprep.subr.mxu0 0.0
    %1418 = vmatpush1.msra.mxu0 %v1373
    %1419 = vmatprep.subr.mxu0 0.0
    %1420 = vmatpush1.msra.mxu0 %v1374
    %1421 = vmatprep.subr.mxu0 0.0
    %1422 = vmatpush1.msra.mxu0 %v1375
    %1423 = vmatprep.subr.mxu0 0.0
    %1424 = vmatpush1.msra.mxu0 %v1376
    %1425 = vmatprep.subr.mxu0 0.0
    %1426 = vmatpush1.msra.mxu0 %v1377
    %1427 = vmatprep.subr.mxu0 0.0
    %1428 = vmatpush1.msra.mxu0 %v1378
    %1429 = vmatprep.subr.mxu0 0.0
    %1430 = vmatpush1.msra.mxu0 %v1379
    %1431 = vmatprep.subr.mxu0 0.0
    %1432 = vmatpush1.msra.mxu0 %v1380
    %1433 = vmatprep.subr.mxu0 0.0
    %1434 = vmatpush1.msra.mxu0 %v1381
    %1435 = vmatprep.subr.mxu0 0.0
    %1436 = vmatpush1.msra.mxu0 %v1382
    %1437 = vmatprep.subr.mxu0 0.0
    %1438 = vmatpush1.msra.mxu0 %v1383
    %1439 = vmatprep.subr.mxu0 0.0
    %1440 = vmatpush1.msra.mxu0 %v1384
    %1441 = vmatprep.subr.mxu0 0.0
    %1442 = vmatpush1.msra.mxu0 %v1385
    %1443 = vmatprep.subr.mxu0 0.0
    %1444 = vmatpush1.msra.mxu0 %v1386
    %1445 = vmatprep.subr.mxu0 0.0
    %1446 = vmatpush1.msra.mxu0 %v1387
    %1447 = vmatprep.subr.mxu0 0.0
    %1448 = vmatpush1.msra.mxu0 %v1388
    %1449 = vmatprep.subr.mxu0 0.0
    %1450 = vmatpush1.msra.mxu0 %v1389
    %1451 = vmatprep.subr.mxu0 0.0
    %1452 = vmatpush1.msra.mxu0 %v1390
    %1453 = vmatprep.subr.mxu0 0.0
    %1454 = vmatpush1.msra.mxu0 %v1391
    %1455 = vmatprep.subr.mxu0 0.0
    %1456 = vmatpush1.msra.mxu0 %v1392
    %1457 = vmatprep.subr.mxu0 0.0
    %1458 = vmatpush1.msra.mxu0 %v1393
    %1459 = vmatprep.subr.mxu0 0.0
    %1460 = vmatpush1.msra.mxu0 %v1394
    %1461 = vmatprep.subr.mxu0 0.0
    %1462 = vmatpush1.msra.mxu0 %v1395
    %1463 = vmatprep.subr.mxu0 0.0
    %1464 = vmatpush1.msra.mxu0 %v1396
    %1465 = vmatprep.mubr.f32.mxu0 %v1350
    %1466 = vmatmul.mubr.f32.gmra.mrb[0].mxu0 %v1349
    %v1467 = vpop.f32.mrb[0].mxu0
    %v1468 = vadd.f32 %v1400, %v1467
    %v1469 = vpop.f32.mrb[0].mxu0
    %1470 = vmatprep.mubr.f32.mxu0 %v1352
    %1471 = vmatmul.mubr.f32.gmra.mrb[0].mxu0 %v1351
    %v1472 = vpop.f32.mrb[0].mxu0
    %v1473 = vadd.f32 %v1400, %v1472
    %v1474 = vpop.f32.mrb[0].mxu0
    %1475 = vmatprep.mubr.f32.mxu0 %v1354
    %1476 = vmatmul.mubr.f32.gmra.mrb[0].mxu0 %v1353
    %v1477 = vpop.f32.mrb[0].mxu0
    %v1478 = vadd.f32 %v1400, %v1477
    %v1479 = vpop.f32.mrb[0].mxu0
    %1480 = vmatprep.mubr.f32.mxu0 %v1356
    %1481 = vmatmul.mubr.f32.gmra.mrb[0].mxu0 %v1355
    %v1482 = vpop.f32.mrb[0].mxu0
    %v1483 = vadd.f32 %v1400, %v1482
    %v1484 = vpop.f32.mrb[0].mxu0
    %1485 = vmatprep.mubr.f32.mxu0 %v1358
    %1486 = vmatmul.mubr.f32.gmra.mrb[0].mxu0 %v1357
    %v1487 = vpop.f32.mrb[0].mxu0
    %v1488 = vadd.f32 %v1400, %v1487
    %v1489 = vpop.f32.mrb[0].mxu0
    %1490 = vmatprep.mubr.f32.mxu0 %v1360
    %1491 = vmatmul.mubr.f32.gmra.mrb[0].mxu0 %v1359
    %v1492 = vpop.f32.mrb[0].mxu0
    %v1493 = vadd.f32 %v1400, %v1492
    %v1494 = vpop.f32.mrb[0].mxu0
    %1495 = vmatprep.mubr.f32.mxu0 %v1362
    %1496 = vmatmul.mubr.f32.gmra.mrb[0].mxu0 %v1361
    %v1497 = vpop.f32.mrb[0].mxu0
    %v1498 = vadd.f32 %v1400, %v1497
    %v1499 = vpop.f32.mrb[0].mxu0
    %1500 = vmatprep.mubr.f32.mxu0 %v1364
    %1501 = vmatmul.mubr.f32.gmra.mrb[0].mxu0 %v1363
    %v1502 = vpop.f32.mrb[0].mxu0
    %v1503 = vadd.f32 %v1400, %v1502
    %v1504 = vpop.f32.mrb[0].mxu0
    %1505 = vdwg.mxu0
    %v1506 = vmax.f32 %v1468, 0.0
    %v1507 = vmax.f32 %v1473, 0.0
    %v1508 = vmax.f32 %v1478, 0.0
    %v1509 = vmax.f32 %v1483, 0.0
    %v1510 = vmax.f32 %v1488, 0.0
    %v1511 = vmax.f32 %v1493, 0.0
    %v1512 = vmax.f32 %v1498, 0.0
    %v1513 = vmax.f32 %v1503, 0.0
    %v1514 = vlaneseq
    %v1515 = vshrl.u32 %v1514, 7
    %v1516 = vsub.s32 7, %v1515
    %v1517 = vrot.slane %v89, %v1516
    %v1518 = vmul.f32 %v1506, %v1517
    %v1519 = vmul.f32 %v1507, %v1517
    %v1520 = vmul.f32 %v1508, %v1517
    %v1521 = vmul.f32 %v1509, %v1517
    %v1522 = vmul.f32 %v1510, %v1517
    %v1523 = vmul.f32 %v1511, %v1517
    %v1524 = vmul.f32 %v1512, %v1517
    %v1525 = vmul.f32 %v1513, %v1517
    %1526 = vadd.xlane.f32.xlu0 %v1518
    %v1527 = vpop.xlane.xlu0 %1526
    %1528 = vadd.xlane.f32.xlu0 %v1519
    %v1529 = vpop.xlane.xlu0 %1528
    %1530 = vadd.xlane.f32.xlu0 %v1520
    %v1531 = vpop.xlane.xlu0 %1530
    %1532 = vadd.xlane.f32.xlu0 %v1521
    %v1533 = vpop.xlane.xlu0 %1532
    %1534 = vadd.xlane.f32.xlu0 %v1522
    %v1535 = vpop.xlane.xlu0 %1534
    %1536 = vadd.xlane.f32.xlu0 %v1523
    %v1537 = vpop.xlane.xlu0 %1536
    %1538 = vadd.xlane.f32.xlu0 %v1524
    %v1539 = vpop.xlane.xlu0 %1538
    %1540 = vadd.xlane.f32.xlu0 %v1525
    %v1541 = vpop.xlane.xlu0 %1540
    %v1542 = vlaneseq
    %v1543 = vshrl.u32 %v1542, 7
    %v1544 = vsub.s32 7, %v1543
    %v1545 = vrot.slane %v90, %v1544
    %v1546 = vadd.f32 %v1527, %v1545
    %v1547 = vadd.f32 %v1529, %v1545
    %v1548 = vadd.f32 %v1531, %v1545
    %v1549 = vadd.f32 %v1533, %v1545
    %v1550 = vadd.f32 %v1535, %v1545
    %v1551 = vadd.f32 %v1537, %v1545
    %v1552 = vadd.f32 %v1539, %v1545
    %v1553 = vadd.f32 %v1541, %v1545
    %vm1554 = vcmask 7168
    %1555 = vst.msk [vmem:[%s7] sm:$0xff] %vm1554, %v1546
    %1556 = vst.msk [vmem:[%s7 + $0x8] sm:$0xff] %vm1554, %v1547
    %1557 = vst.msk [vmem:[%s7 + $0x10] sm:$0xff] %vm1554, %v1548
    %1558 = vst.msk [vmem:[%s7 + $0x18] sm:$0xff] %vm1554, %v1549
    %1559 = vst.msk [vmem:[%s7 + $0x20] sm:$0xff] %vm1554, %v1550
    %1560 = vst.msk [vmem:[%s7 + $0x28] sm:$0xff] %vm1554, %v1551
    %1561 = vst.msk [vmem:[%s7 + $0x30] sm:$0xff] %vm1554, %v1552
    %1562 = vst.msk [vmem:[%s7 + $0x38] sm:$0xff] %vm1554, %v1553
    // Predicated region
    $region46: #{tpu_custom_call.1} parent=1 // pred_check
      _
    $region47: #{tpu_custom_call.1} parent=1 // pred_check_branch
      %1564 = sbr.rel (0) target = $region49
    $region48: #{tpu_custom_call.1} parent=1 // pred_region
      _
    $region49: #{tpu_custom_call.1} parent=1 // pred_fallthru
      _
    // Predicated region
    $region50: #{tpu_custom_call.1} parent=1 // pred_check
      _
    $region51: #{tpu_custom_call.1} parent=1 // pred_check_branch
      %1566 = sbr.rel (0) target = $region53
    $region52: #{tpu_custom_call.1} parent=1 // pred_region
      _
    $region53: #{tpu_custom_call.1} parent=1 // pred_fallthru
      _
    %1567 = vsyncpa [#allocation4], 1
    %1568 = vsyncpa [#allocation6], 1
    %1569 = vsyncpa [#allocation9], 1

</llo_original>
